<compile_context>
chip_gen: v7x
topology: tpu7x:2x2x1
jax: 0.10.0
libtpu: 0.0.40
codegen_flags: <defaults>
</compile_context>

<pallas_src>
import functools

import jax
import jax.numpy as jnp
from jax.experimental import pallas as pl
from jax.experimental.pallas import tpu as pltpu

BN_EPS = 1e-5
_LANE = 128
# Explicit scoped-VMEM limit: above the 16/32 MiB defaults, below v7x's
# 64 MiB physical (leaves headroom for internal scratch).
_VMEM_LIMIT = 48 * 1024 * 1024


def block_config(in_planes, out_planes, stride):
    """Mirror Block.__init__ conv hyper-parameter selection."""
    if stride in (1, 3):
        if in_planes == out_planes:
            return dict(kernel_size=stride, conv_stride=1, padding=0)
        return dict(kernel_size=1, conv_stride=stride, padding=0)
    elif stride == 2:
        return dict(kernel_size=3, conv_stride=2, padding=1)
    raise ValueError(f"unsupported stride {stride}")


# ---------------------------------------------------------------------------
# Kernel 1: fused im2col conv (per-tap GEMMs) + partial BatchNorm statistics.
# ---------------------------------------------------------------------------
def _conv_stats_kernel(x_ref, w_ref, y_ref, sum_ref, sq_ref, acc_ref, *,
                       K, S, Ho, Wo):
    # x_ref   : (1, S*S, Hc, Wc, Cin)  stride-phase-decomposed padded input
    # w_ref   : (K*K, Cin, Cpad)       per-tap weights, Cout zero-padded to 128
    # y_ref   : (1, Ho*Wo, Cpad)       f32 conv output (this sample)
    # sum_ref : (1, 1, Cpad)           per-sample partial sum over rows
    # sq_ref  : (1, 1, Cpad)           per-sample partial sum of squares
    # acc_ref : (Ho*Wo, Cpad) f32      VMEM accumulator
    acc_ref[...] = jnp.zeros_like(acc_ref)
    t = 0
    for kh in range(K):          # static unroll: K*K <= 9 taps
        for kw in range(K):
            p, a = kh % S, kh // S
            q, b = kw % S, kw // S
            xt = x_ref[0, p * S + q, a:a + Ho, b:b + Wo, :]
            xt = xt.reshape(Ho * Wo, xt.shape[-1])
            acc_ref[...] += jnp.dot(xt, w_ref[t],
                                    preferred_element_type=jnp.float32)
            t += 1
    acc = acc_ref[...]
    y_ref[0] = acc
    sum_ref[0] = jnp.sum(acc, axis=0, keepdims=True)
    sq_ref[0] = jnp.sum(acc * acc, axis=0, keepdims=True)


# ---------------------------------------------------------------------------
# Kernel 2: tiled, lane-dense BatchNorm apply + ReLU.
# ---------------------------------------------------------------------------
def _bn_relu_kernel(y_ref, scale_ref, shift_ref, o_ref):
    # y_ref: (TM, Cpad) f32; scale/shift: (1, Cpad) f32 (gamma*inv, beta-mean*gamma*inv)
    o_ref[...] = jnp.maximum(
        y_ref[...] * scale_ref[...] + shift_ref[...], 0.0).astype(o_ref.dtype)


def _pick_m_tile(M, Cpad):
    """Largest M tile that divides M and keeps the BN pass well inside VMEM."""
    budget = 8 * 1024 * 1024                      # per-stream budget (f32, 2 bufs, in+out)
    cap = max(8, budget // (Cpad * 4 * 4))
    for t in (2048, 1024, 512, 256, 128, 64, 32, 16, 8):
        if t <= cap and M % t == 0:
            return t
    return M                                      # full-extent block (always legal)


@functools.partial(
    jax.jit,
    static_argnames=("kernel_size", "conv_stride", "padding", "compute_dtype"))
def block_forward_nhwc(x_nhwc, weight_oihw, gamma, beta, *,
                       kernel_size, conv_stride, padding,
                       compute_dtype=jnp.bfloat16):
    """relu(batchnorm(conv2d(x))) with NHWC activations end-to-end."""
    K, S, P = kernel_size, conv_stride, padding
    N, H, W, Cin = x_nhwc.shape
    Cout = weight_oihw.shape[0]
    Ho = (H + 2 * P - K) // S + 1
    Wo = (W + 2 * P - K) // S + 1
    Cpad = -(-Cout // _LANE) * _LANE              # lane-dense output channels

    # ---- stride-phase decomposition (one cheap copy of x; no K*K blow-up).
    # phase (p, q) = x_pad[:, p::S, q::S, :], so conv tap (kh, kw) is a plain
    # contiguous (Ho, Wo) slice of phase (kh%S, kw%S) at offset (kh//S, kw//S).
    a_max = (K - 1) // S
    Hc = max(Ho + a_max, -(-(H + 2 * P) // S))
    Wc = max(Wo + a_max, -(-(W + 2 * P) // S))
    Hp, Wp = S * Hc, S * Wc
    xp = jnp.pad(x_nhwc, ((0, 0), (P, Hp - H - P), (P, Wp - W - P), (0, 0)))
    phases = (xp.reshape(N, Hc, S, Wc, S, Cin)
                .transpose(0, 2, 4, 1, 3, 5)
                .reshape(N, S * S, Hc, Wc, Cin)
                .astype(compute_dtype))

    # per-tap weights (K*K, Cin, Cpad); zero-padded channels are inert.
    w_taps = jnp.transpose(weight_oihw, (2, 3, 1, 0)).reshape(K * K, Cin, Cout)
    w_taps = jnp.pad(w_taps, ((0, 0), (0, 0), (0, Cpad - Cout))).astype(compute_dtype)

    HoWo = Ho * Wo
    kernel1 = functools.partial(_conv_stats_kernel, K=K, S=S, Ho=Ho, Wo=Wo)
    y, psum, psq = pl.pallas_call(
        kernel1,
        out_shape=(
            jax.ShapeDtypeStruct((N, HoWo, Cpad), jnp.float32),
            jax.ShapeDtypeStruct((N, 1, Cpad), jnp.float32),
            jax.ShapeDtypeStruct((N, 1, Cpad), jnp.float32),
        ),
        grid_spec=pltpu.PrefetchScalarGridSpec(
            num_scalar_prefetch=0,
            grid=(N,),
            in_specs=[
                pl.BlockSpec((1, S * S, Hc, Wc, Cin),
                             lambda n: (n, 0, 0, 0, 0)),
                pl.BlockSpec((K * K, Cin, Cpad), lambda n: (0, 0, 0)),
            ],
            out_specs=(
                pl.BlockSpec((1, HoWo, Cpad), lambda n: (n, 0, 0)),
                pl.BlockSpec((1, 1, Cpad), lambda n: (n, 0, 0)),
                pl.BlockSpec((1, 1, Cpad), lambda n: (n, 0, 0)),
            ),
            scratch_shapes=[pltpu.VMEM((HoWo, Cpad), jnp.float32)],
        ),
        compiler_params=pltpu.CompilerParams(
            dimension_semantics=("parallel",),
            vmem_limit_bytes=_VMEM_LIMIT),
    )(phases, w_taps)

    # ---- global training-mode BatchNorm stats (biased var) from partial sums.
    # Tiny per-channel reduction; fold gamma/beta into one scale/shift tile.
    M = N * HoWo
    tot = jnp.sum(psum, axis=(0, 1))
    tot_sq = jnp.sum(psq, axis=(0, 1))
    mean = tot / M
    var = jnp.maximum(tot_sq / M - mean * mean, 0.0)
    inv = jax.lax.rsqrt(var + BN_EPS)
    gamma_p = jnp.pad(gamma.astype(jnp.float32), (0, Cpad - Cout))
    beta_p = jnp.pad(beta.astype(jnp.float32), (0, Cpad - Cout))
    scale = (gamma_p * inv).reshape(1, Cpad)
    shift = (beta_p - mean * gamma_p * inv).reshape(1, Cpad)

    # ---- pass 2: tiled BN apply + ReLU (lane-dense 128-wide stores).
    y2 = y.reshape(M, Cpad)
    TM = _pick_m_tile(M, Cpad)
    out2d = pl.pallas_call(
        _bn_relu_kernel,
        out_shape=jax.ShapeDtypeStruct((M, Cpad), jnp.float32),
        grid_spec=pltpu.PrefetchScalarGridSpec(
            num_scalar_prefetch=0,
            grid=(M // TM,),
            in_specs=[
                pl.BlockSpec((TM, Cpad), lambda i: (i, 0)),
                pl.BlockSpec((1, Cpad), lambda i: (0, 0)),
                pl.BlockSpec((1, Cpad), lambda i: (0, 0)),
            ],
            out_specs=pl.BlockSpec((TM, Cpad), lambda i: (i, 0)),
        ),
        compiler_params=pltpu.CompilerParams(
            dimension_semantics=("parallel",),
            vmem_limit_bytes=_VMEM_LIMIT),
    )(y2, scale, shift)

    return out2d[:, :Cout].reshape(N, Ho, Wo, Cout)


@functools.partial(
    jax.jit,
    static_argnames=("kernel_size", "conv_stride", "padding", "compute_dtype"))
def block_forward(x_nchw, weight_oihw, gamma, beta, *,
                  kernel_size, conv_stride, padding,
                  compute_dtype=jnp.bfloat16):
    """PyTorch-parity NCHW interface. For stacked Blocks prefer the NHWC path
    (block_forward_nhwc) to avoid the two transposes per Block."""
    x_nhwc = jnp.transpose(x_nchw, (0, 2, 3, 1))
    out_nhwc = block_forward_nhwc(
        x_nhwc, weight_oihw, gamma, beta,
        kernel_size=kernel_size, conv_stride=conv_stride, padding=padding,
        compute_dtype=compute_dtype)
    return jnp.transpose(out_nhwc, (0, 3, 1, 2))


# ---------------------------------------------------------------------------
# Pure-JAX reference (f32, HIGHEST precision) and parameter init.
# ---------------------------------------------------------------------------
def _reference(x_nchw, w, g, b, S, P):
    y = jax.lax.conv_general_dilated(
        x_nchw, w, (S, S), [(P, P), (P, P)],
        dimension_numbers=("NCHW", "OIHW", "NCHW"),
        precision=jax.lax.Precision.HIGHEST)
    mean = y.mean(axis=(0, 2, 3), keepdims=True)
    var = ((y - mean) ** 2).mean(axis=(0, 2, 3), keepdims=True)
    yn = (y - mean) / jnp.sqrt(var + BN_EPS)
    yn = yn * g.reshape(1, -1, 1, 1) + b.reshape(1, -1, 1, 1)
    return jnp.maximum(yn, 0.0)


def _init_params(key, in_planes, out_planes, kernel_size):
    kw, kg, kb = jax.random.split(key, 3)
    fan_in = in_planes * kernel_size * kernel_size
    weight = jax.random.normal(
        kw, (out_planes, in_planes, kernel_size, kernel_size),
        jnp.float32) * (1.0 / jnp.sqrt(fan_in))
    gamma = 1.0 + 0.1 * jax.random.normal(kg, (out_planes,), jnp.float32)
    beta = 0.1 * jax.random.normal(kb, (out_planes,), jnp.float32)
    return weight, gamma, beta


if __name__ == "__main__":
    key = jax.random.PRNGKey(0)
    kx, kp1, kp2 = jax.random.split(key, 3)

    # Input: batch=2, channels=8, spatial=16x16 (NCHW, like the PyTorch module)
    x = jax.random.normal(kx, (2, 8, 16, 16), jnp.float32)

    # Case 1: Block(8, 16, stride=2) -> 3x3 conv, stride 2, pad 1
    cfg1 = block_config(8, 16, 2)
    w1, g1, b1 = _init_params(kp1, 8, 16, cfg1["kernel_size"])
    out1 = block_forward(x, w1, g1, b1, **cfg1)                       # bf16 MXU path
    out1_f32 = block_forward(x, w1, g1, b1, compute_dtype=jnp.float32, **cfg1)
    ref1 = _reference(x, w1, g1, b1, cfg1["conv_stride"], cfg1["padding"])

    # Case 2: Block(8, 8, stride=1) -> 1x1 conv, stride 1, pad 0
    cfg2 = block_config(8, 8, 1)
    w2, g2, b2 = _init_params(kp2, 8, 8, cfg2["kernel_size"])
    out2 = block_forward(x, w2, g2, b2, **cfg2)                       # bf16 MXU path
    ref2 = _reference(x, w2, g2, b2, cfg2["conv_stride"], cfg2["padding"])

    jax.block_until_ready((out1, out1_f32, out2))

    assert out1.shape == (2, 16, 8, 8), out1.shape
    assert out2.shape == (2, 8, 16, 16), out2.shape
    # Tight check with f32 compute path; bf16 MXU paths checked at mixed-precision tolerance.
    assert jnp.allclose(out1_f32, ref1, atol=1e-3, rtol=1e-3)
    assert jnp.allclose(out1, ref1, atol=5e-2, rtol=5e-2)
    assert jnp.allclose(out2, ref2, atol=5e-2, rtol=5e-2)

    print("KERNEL_OK")
</pallas_src>

<mosaic_0001>
module attributes {stable_mosaic.version = 11 : i64} {
  func.func @_conv_stats_kernel(%arg0: i32, %arg1: memref<1x4x9x9x8xbf16, #tpu.memory_space<vmem>>, %arg2: memref<9x8x128xbf16, #tpu.memory_space<vmem>>, %arg3: memref<1x64x128xf32, #tpu.memory_space<vmem>>, %arg4: memref<1x1x128xf32, #tpu.memory_space<vmem>>, %arg5: memref<1x1x128xf32, #tpu.memory_space<vmem>>, %arg6: memref<64x128xf32, #tpu.memory_space<vmem>>) attributes {dimension_semantics = [#tpu.dimension_semantics<parallel>], iteration_bounds = array<i64: 2>, scalar_prefetch = 0 : i64, scratch_operands = 1 : i64, tpu.core_type = #tpu.core_type<tc>, window_params = [{transform_indices = @transform_0, window_bounds = array<i64: 1, 4, 9, 9, 8>}, {pipeline_mode = #tpu.pipeline_mode<synchronous>, transform_indices = @transform_1, window_bounds = array<i64: 9, 8, 128>}, {transform_indices = @transform_2, window_bounds = array<i64: 1, 64, 128>}, {transform_indices = @transform_3, window_bounds = array<i64: 1, 1, 128>}, {transform_indices = @transform_4, window_bounds = array<i64: 1, 1, 128>}]} {
    %cst = arith.constant 0.000000e+00 : f32
    %0 = vector.broadcast %cst : f32 to vector<64x128xf32>
    %c0 = arith.constant 0 : index
    %c0_0 = arith.constant 0 : index
    %1 = vector.load %arg6[%c0, %c0_0] : memref<64x128xf32, #tpu.memory_space<vmem>>, vector<64x128xf32>
    tpu.vector_store %arg6[%c0, %c0_0], %0 {strides = array<i32>} : memref<64x128xf32, #tpu.memory_space<vmem>>, vector<64x128xf32>,
    %c0_1 = arith.constant 0 : index
    %c0_2 = arith.constant 0 : index
    %c0_3 = arith.constant 0 : index
    %c0_4 = arith.constant 0 : index
    %c0_5 = arith.constant 0 : index
    %2 = vector.load %arg1[%c0_1, %c0_2, %c0_3, %c0_4, %c0_5] : memref<1x4x9x9x8xbf16, #tpu.memory_space<vmem>>, vector<1x1x8x8x8xbf16>
    %3 = vector.shape_cast %2 : vector<1x1x8x8x8xbf16> to vector<8x8x8xbf16>
    %4 = vector.shape_cast %3 : vector<8x8x8xbf16> to vector<64x8xbf16>
    %c0_6 = arith.constant 0 : index
    %c0_7 = arith.constant 0 : index
    %5 = vector.load %arg6[%c0_6, %c0_7] : memref<64x128xf32, #tpu.memory_space<vmem>>, vector<64x128xf32>
    %c0_8 = arith.constant 0 : index
    %c0_9 = arith.constant 0 : index
    %c0_10 = arith.constant 0 : index
    %6 = vector.load %arg2[%c0_8, %c0_9, %c0_10] : memref<9x8x128xbf16, #tpu.memory_space<vmem>>, vector<1x8x128xbf16>
    %7 = vector.shape_cast %6 : vector<1x8x128xbf16> to vector<8x128xbf16>
    %cst_11 = arith.constant dense<0.000000e+00> : vector<64x128xf32>
    %8 = tpu.matmul %4, %7, %cst_11 {dimension_numbers = #tpu.dot_dimension_numbers<[1], [0], [0], [1], [0, 0, 1, 1], [], []>} : vector<64x8xbf16>, vector<8x128xbf16>, vector<64x128xf32> -> vector<64x128xf32>
    %9 = arith.addf %5, %8 : vector<64x128xf32>
    %c0_12 = arith.constant 0 : index
    %c0_13 = arith.constant 0 : index
    %10 = vector.load %arg6[%c0_12, %c0_13] : memref<64x128xf32, #tpu.memory_space<vmem>>, vector<64x128xf32>
    tpu.vector_store %arg6[%c0_12, %c0_13], %9 {strides = array<i32>} : memref<64x128xf32, #tpu.memory_space<vmem>>, vector<64x128xf32>,
    %c0_14 = arith.constant 0 : index
    %c1 = arith.constant 1 : index
    %c0_15 = arith.constant 0 : index
    %c0_16 = arith.constant 0 : index
    %c0_17 = arith.constant 0 : index
    %11 = vector.load %arg1[%c0_14, %c1, %c0_15, %c0_16, %c0_17] : memref<1x4x9x9x8xbf16, #tpu.memory_space<vmem>>, vector<1x1x8x8x8xbf16>
    %12 = vector.shape_cast %11 : vector<1x1x8x8x8xbf16> to vector<8x8x8xbf16>
    %13 = vector.shape_cast %12 : vector<8x8x8xbf16> to vector<64x8xbf16>
    %c0_18 = arith.constant 0 : index
    %c0_19 = arith.constant 0 : index
    %14 = vector.load %arg6[%c0_18, %c0_19] : memref<64x128xf32, #tpu.memory_space<vmem>>, vector<64x128xf32>
    %c1_20 = arith.constant 1 : index
    %c0_21 = arith.constant 0 : index
    %c0_22 = arith.constant 0 : index
    %15 = vector.load %arg2[%c1_20, %c0_21, %c0_22] : memref<9x8x128xbf16, #tpu.memory_space<vmem>>, vector<1x8x128xbf16>
    %16 = vector.shape_cast %15 : vector<1x8x128xbf16> to vector<8x128xbf16>
    %cst_23 = arith.constant dense<0.000000e+00> : vector<64x128xf32>
    %17 = tpu.matmul %13, %16, %cst_23 {dimension_numbers = #tpu.dot_dimension_numbers<[1], [0], [0], [1], [0, 0, 1, 1], [], []>} : vector<64x8xbf16>, vector<8x128xbf16>, vector<64x128xf32> -> vector<64x128xf32>
    %18 = arith.addf %14, %17 : vector<64x128xf32>
    %c0_24 = arith.constant 0 : index
    %c0_25 = arith.constant 0 : index
    %19 = vector.load %arg6[%c0_24, %c0_25] : memref<64x128xf32, #tpu.memory_space<vmem>>, vector<64x128xf32>
    tpu.vector_store %arg6[%c0_24, %c0_25], %18 {strides = array<i32>} : memref<64x128xf32, #tpu.memory_space<vmem>>, vector<64x128xf32>,
    %c0_26 = arith.constant 0 : index
    %c0_27 = arith.constant 0 : index
    %c0_28 = arith.constant 0 : index
    %c1_29 = arith.constant 1 : index
    %c0_30 = arith.constant 0 : index
    %20 = vector.load %arg1[%c0_26, %c0_27, %c0_28, %c1_29, %c0_30] : memref<1x4x9x9x8xbf16, #tpu.memory_space<vmem>>, vector<1x1x8x8x8xbf16>
    %21 = vector.shape_cast %20 : vector<1x1x8x8x8xbf16> to vector<8x8x8xbf16>
    %22 = vector.shape_cast %21 : vector<8x8x8xbf16> to vector<64x8xbf16>
    %c0_31 = arith.constant 0 : index
    %c0_32 = arith.constant 0 : index
    %23 = vector.load %arg6[%c0_31, %c0_32] : memref<64x128xf32, #tpu.memory_space<vmem>>, vector<64x128xf32>
    %c2 = arith.constant 2 : index
    %c0_33 = arith.constant 0 : index
    %c0_34 = arith.constant 0 : index
    %24 = vector.load %arg2[%c2, %c0_33, %c0_34] : memref<9x8x128xbf16, #tpu.memory_space<vmem>>, vector<1x8x128xbf16>
    %25 = vector.shape_cast %24 : vector<1x8x128xbf16> to vector<8x128xbf16>
    %cst_35 = arith.constant dense<0.000000e+00> : vector<64x128xf32>
    %26 = tpu.matmul %22, %25, %cst_35 {dimension_numbers = #tpu.dot_dimension_numbers<[1], [0], [0], [1], [0, 0, 1, 1], [], []>} : vector<64x8xbf16>, vector<8x128xbf16>, vector<64x128xf32> -> vector<64x128xf32>
    %27 = arith.addf %23, %26 : vector<64x128xf32>
    %c0_36 = arith.constant 0 : index
    %c0_37 = arith.constant 0 : index
    %28 = vector.load %arg6[%c0_36, %c0_37] : memref<64x128xf32, #tpu.memory_space<vmem>>, vector<64x128xf32>
    tpu.vector_store %arg6[%c0_36, %c0_37], %27 {strides = array<i32>} : memref<64x128xf32, #tpu.memory_space<vmem>>, vector<64x128xf32>,
    %c0_38 = arith.constant 0 : index
    %c2_39 = arith.constant 2 : index
    %c0_40 = arith.constant 0 : index
    %c0_41 = arith.constant 0 : index
    %c0_42 = arith.constant 0 : index
    %29 = vector.load %arg1[%c0_38, %c2_39, %c0_40, %c0_41, %c0_42] : memref<1x4x9x9x8xbf16, #tpu.memory_space<vmem>>, vector<1x1x8x8x8xbf16>
    %30 = vector.shape_cast %29 : vector<1x1x8x8x8xbf16> to vector<8x8x8xbf16>
    %31 = vector.shape_cast %30 : vector<8x8x8xbf16> to vector<64x8xbf16>
    %c0_43 = arith.constant 0 : index
    %c0_44 = arith.constant 0 : index
    %32 = vector.load %arg6[%c0_43, %c0_44] : memref<64x128xf32, #tpu.memory_space<vmem>>, vector<64x128xf32>
    %c3 = arith.constant 3 : index
    %c0_45 = arith.constant 0 : index
    %c0_46 = arith.constant 0 : index
    %33 = vector.load %arg2[%c3, %c0_45, %c0_46] : memref<9x8x128xbf16, #tpu.memory_space<vmem>>, vector<1x8x128xbf16>
    %34 = vector.shape_cast %33 : vector<1x8x128xbf16> to vector<8x128xbf16>
    %cst_47 = arith.constant dense<0.000000e+00> : vector<64x128xf32>
    %35 = tpu.matmul %31, %34, %cst_47 {dimension_numbers = #tpu.dot_dimension_numbers<[1], [0], [0], [1], [0, 0, 1, 1], [], []>} : vector<64x8xbf16>, vector<8x128xbf16>, vector<64x128xf32> -> vector<64x128xf32>
    %36 = arith.addf %32, %35 : vector<64x128xf32>
    %c0_48 = arith.constant 0 : index
    %c0_49 = arith.constant 0 : index
    %37 = vector.load %arg6[%c0_48, %c0_49] : memref<64x128xf32, #tpu.memory_space<vmem>>, vector<64x128xf32>
    tpu.vector_store %arg6[%c0_48, %c0_49], %36 {strides = array<i32>} : memref<64x128xf32, #tpu.memory_space<vmem>>, vector<64x128xf32>,
    %c0_50 = arith.constant 0 : index
    %c3_51 = arith.constant 3 : index
    %c0_52 = arith.constant 0 : index
    %c0_53 = arith.constant 0 : index
    %c0_54 = arith.constant 0 : index
    %38 = vector.load %arg1[%c0_50, %c3_51, %c0_52, %c0_53, %c0_54] : memref<1x4x9x9x8xbf16, #tpu.memory_space<vmem>>, vector<1x1x8x8x8xbf16>
    %39 = vector.shape_cast %38 : vector<1x1x8x8x8xbf16> to vector<8x8x8xbf16>
    %40 = vector.shape_cast %39 : vector<8x8x8xbf16> to vector<64x8xbf16>
    %c0_55 = arith.constant 0 : index
    %c0_56 = arith.constant 0 : index
    %41 = vector.load %arg6[%c0_55, %c0_56] : memref<64x128xf32, #tpu.memory_space<vmem>>, vector<64x128xf32>
    %c4 = arith.constant 4 : index
    %c0_57 = arith.constant 0 : index
    %c0_58 = arith.constant 0 : index
    %42 = vector.load %arg2[%c4, %c0_57, %c0_58] : memref<9x8x128xbf16, #tpu.memory_space<vmem>>, vector<1x8x128xbf16>
    %43 = vector.shape_cast %42 : vector<1x8x128xbf16> to vector<8x128xbf16>
    %cst_59 = arith.constant dense<0.000000e+00> : vector<64x128xf32>
    %44 = tpu.matmul %40, %43, %cst_59 {dimension_numbers = #tpu.dot_dimension_numbers<[1], [0], [0], [1], [0, 0, 1, 1], [], []>} : vector<64x8xbf16>, vector<8x128xbf16>, vector<64x128xf32> -> vector<64x128xf32>
    %45 = arith.addf %41, %44 : vector<64x128xf32>
    %c0_60 = arith.constant 0 : index
    %c0_61 = arith.constant 0 : index
    %46 = vector.load %arg6[%c0_60, %c0_61] : memref<64x128xf32, #tpu.memory_space<vmem>>, vector<64x128xf32>
    tpu.vector_store %arg6[%c0_60, %c0_61], %45 {strides = array<i32>} : memref<64x128xf32, #tpu.memory_space<vmem>>, vector<64x128xf32>,
    %c0_62 = arith.constant 0 : index
    %c2_63 = arith.constant 2 : index
    %c0_64 = arith.constant 0 : index
    %c1_65 = arith.constant 1 : index
    %c0_66 = arith.constant 0 : index
    %47 = vector.load %arg1[%c0_62, %c2_63, %c0_64, %c1_65, %c0_66] : memref<1x4x9x9x8xbf16, #tpu.memory_space<vmem>>, vector<1x1x8x8x8xbf16>
    %48 = vector.shape_cast %47 : vector<1x1x8x8x8xbf16> to vector<8x8x8xbf16>
    %49 = vector.shape_cast %48 : vector<8x8x8xbf16> to vector<64x8xbf16>
    %c0_67 = arith.constant 0 : index
    %c0_68 = arith.constant 0 : index
    %50 = vector.load %arg6[%c0_67, %c0_68] : memref<64x128xf32, #tpu.memory_space<vmem>>, vector<64x128xf32>
    %c5 = arith.constant 5 : index
    %c0_69 = arith.constant 0 : index
    %c0_70 = arith.constant 0 : index
    %51 = vector.load %arg2[%c5, %c0_69, %c0_70] : memref<9x8x128xbf16, #tpu.memory_space<vmem>>, vector<1x8x128xbf16>
    %52 = vector.shape_cast %51 : vector<1x8x128xbf16> to vector<8x128xbf16>
    %cst_71 = arith.constant dense<0.000000e+00> : vector<64x128xf32>
    %53 = tpu.matmul %49, %52, %cst_71 {dimension_numbers = #tpu.dot_dimension_numbers<[1], [0], [0], [1], [0, 0, 1, 1], [], []>} : vector<64x8xbf16>, vector<8x128xbf16>, vector<64x128xf32> -> vector<64x128xf32>
    %54 = arith.addf %50, %53 : vector<64x128xf32>
    %c0_72 = arith.constant 0 : index
    %c0_73 = arith.constant 0 : index
    %55 = vector.load %arg6[%c0_72, %c0_73] : memref<64x128xf32, #tpu.memory_space<vmem>>, vector<64x128xf32>
    tpu.vector_store %arg6[%c0_72, %c0_73], %54 {strides = array<i32>} : memref<64x128xf32, #tpu.memory_space<vmem>>, vector<64x128xf32>,
    %c0_74 = arith.constant 0 : index
    %c0_75 = arith.constant 0 : index
    %c1_76 = arith.constant 1 : index
    %c0_77 = arith.constant 0 : index
    %c0_78 = arith.constant 0 : index
    %56 = vector.load %arg1[%c0_74, %c0_75, %c1_76, %c0_77, %c0_78] : memref<1x4x9x9x8xbf16, #tpu.memory_space<vmem>>, vector<1x1x8x8x8xbf16>
    %57 = vector.shape_cast %56 : vector<1x1x8x8x8xbf16> to vector<8x8x8xbf16>
    %58 = vector.shape_cast %57 : vector<8x8x8xbf16> to vector<64x8xbf16>
    %c0_79 = arith.constant 0 : index
    %c0_80 = arith.constant 0 : index
    %59 = vector.load %arg6[%c0_79, %c0_80] : memref<64x128xf32, #tpu.memory_space<vmem>>, vector<64x128xf32>
    %c6 = arith.constant 6 : index
    %c0_81 = arith.constant 0 : index
    %c0_82 = arith.constant 0 : index
    %60 = vector.load %arg2[%c6, %c0_81, %c0_82] : memref<9x8x128xbf16, #tpu.memory_space<vmem>>, vector<1x8x128xbf16>
    %61 = vector.shape_cast %60 : vector<1x8x128xbf16> to vector<8x128xbf16>
    %cst_83 = arith.constant dense<0.000000e+00> : vector<64x128xf32>
    %62 = tpu.matmul %58, %61, %cst_83 {dimension_numbers = #tpu.dot_dimension_numbers<[1], [0], [0], [1], [0, 0, 1, 1], [], []>} : vector<64x8xbf16>, vector<8x128xbf16>, vector<64x128xf32> -> vector<64x128xf32>
    %63 = arith.addf %59, %62 : vector<64x128xf32>
    %c0_84 = arith.constant 0 : index
    %c0_85 = arith.constant 0 : index
    %64 = vector.load %arg6[%c0_84, %c0_85] : memref<64x128xf32, #tpu.memory_space<vmem>>, vector<64x128xf32>
    tpu.vector_store %arg6[%c0_84, %c0_85], %63 {strides = array<i32>} : memref<64x128xf32, #tpu.memory_space<vmem>>, vector<64x128xf32>,
    %c0_86 = arith.constant 0 : index
    %c1_87 = arith.constant 1 : index
    %c1_88 = arith.constant 1 : index
    %c0_89 = arith.constant 0 : index
    %c0_90 = arith.constant 0 : index
    %65 = vector.load %arg1[%c0_86, %c1_87, %c1_88, %c0_89, %c0_90] : memref<1x4x9x9x8xbf16, #tpu.memory_space<vmem>>, vector<1x1x8x8x8xbf16>
    %66 = vector.shape_cast %65 : vector<1x1x8x8x8xbf16> to vector<8x8x8xbf16>
    %67 = vector.shape_cast %66 : vector<8x8x8xbf16> to vector<64x8xbf16>
    %c0_91 = arith.constant 0 : index
    %c0_92 = arith.constant 0 : index
    %68 = vector.load %arg6[%c0_91, %c0_92] : memref<64x128xf32, #tpu.memory_space<vmem>>, vector<64x128xf32>
    %c7 = arith.constant 7 : index
    %c0_93 = arith.constant 0 : index
    %c0_94 = arith.constant 0 : index
    %69 = vector.load %arg2[%c7, %c0_93, %c0_94] : memref<9x8x128xbf16, #tpu.memory_space<vmem>>, vector<1x8x128xbf16>
    %70 = vector.shape_cast %69 : vector<1x8x128xbf16> to vector<8x128xbf16>
    %cst_95 = arith.constant dense<0.000000e+00> : vector<64x128xf32>
    %71 = tpu.matmul %67, %70, %cst_95 {dimension_numbers = #tpu.dot_dimension_numbers<[1], [0], [0], [1], [0, 0, 1, 1], [], []>} : vector<64x8xbf16>, vector<8x128xbf16>, vector<64x128xf32> -> vector<64x128xf32>
    %72 = arith.addf %68, %71 : vector<64x128xf32>
    %c0_96 = arith.constant 0 : index
    %c0_97 = arith.constant 0 : index
    %73 = vector.load %arg6[%c0_96, %c0_97] : memref<64x128xf32, #tpu.memory_space<vmem>>, vector<64x128xf32>
    tpu.vector_store %arg6[%c0_96, %c0_97], %72 {strides = array<i32>} : memref<64x128xf32, #tpu.memory_space<vmem>>, vector<64x128xf32>,
    %c0_98 = arith.constant 0 : index
    %c0_99 = arith.constant 0 : index
    %c1_100 = arith.constant 1 : index
    %c1_101 = arith.constant 1 : index
    %c0_102 = arith.constant 0 : index
    %74 = vector.load %arg1[%c0_98, %c0_99, %c1_100, %c1_101, %c0_102] : memref<1x4x9x9x8xbf16, #tpu.memory_space<vmem>>, vector<1x1x8x8x8xbf16>
    %75 = vector.shape_cast %74 : vector<1x1x8x8x8xbf16> to vector<8x8x8xbf16>
    %76 = vector.shape_cast %75 : vector<8x8x8xbf16> to vector<64x8xbf16>
    %c0_103 = arith.constant 0 : index
    %c0_104 = arith.constant 0 : index
    %77 = vector.load %arg6[%c0_103, %c0_104] : memref<64x128xf32, #tpu.memory_space<vmem>>, vector<64x128xf32>
    %c8 = arith.constant 8 : index
    %c0_105 = arith.constant 0 : index
    %c0_106 = arith.constant 0 : index
    %78 = vector.load %arg2[%c8, %c0_105, %c0_106] : memref<9x8x128xbf16, #tpu.memory_space<vmem>>, vector<1x8x128xbf16>
    %79 = vector.shape_cast %78 : vector<1x8x128xbf16> to vector<8x128xbf16>
    %cst_107 = arith.constant dense<0.000000e+00> : vector<64x128xf32>
    %80 = tpu.matmul %76, %79, %cst_107 {dimension_numbers = #tpu.dot_dimension_numbers<[1], [0], [0], [1], [0, 0, 1, 1], [], []>} : vector<64x8xbf16>, vector<8x128xbf16>, vector<64x128xf32> -> vector<64x128xf32>
    %81 = arith.addf %77, %80 : vector<64x128xf32>
    %c0_108 = arith.constant 0 : index
    %c0_109 = arith.constant 0 : index
    %82 = vector.load %arg6[%c0_108, %c0_109] : memref<64x128xf32, #tpu.memory_space<vmem>>, vector<64x128xf32>
    tpu.vector_store %arg6[%c0_108, %c0_109], %81 {strides = array<i32>} : memref<64x128xf32, #tpu.memory_space<vmem>>, vector<64x128xf32>,
    %c0_110 = arith.constant 0 : index
    %c0_111 = arith.constant 0 : index
    %83 = vector.load %arg6[%c0_110, %c0_111] : memref<64x128xf32, #tpu.memory_space<vmem>>, vector<64x128xf32>
    %c0_112 = arith.constant 0 : index
    %c0_113 = arith.constant 0 : index
    %c0_114 = arith.constant 0 : index
    %84 = vector.load %arg3[%c0_112, %c0_113, %c0_114] : memref<1x64x128xf32, #tpu.memory_space<vmem>>, vector<1x64x128xf32>
    %85 = vector.shape_cast %84 : vector<1x64x128xf32> to vector<64x128xf32>
    %86 = vector.shape_cast %83 : vector<64x128xf32> to vector<1x64x128xf32>
    tpu.vector_store %arg3[%c0_112, %c0_113, %c0_114], %86 {strides = array<i32>} : memref<1x64x128xf32, #tpu.memory_space<vmem>>, vector<1x64x128xf32>,
    %cst_115 = arith.constant dense<0.000000e+00> : vector<128xf32>
    %87 = vector.multi_reduction <add>, %83, %cst_115 [0] : vector<64x128xf32> to vector<128xf32>
    %88 = vector.shape_cast %87 : vector<128xf32> to vector<1x128xf32>
    %c0_116 = arith.constant 0 : index
    %c0_117 = arith.constant 0 : index
    %c0_118 = arith.constant 0 : index
    %89 = vector.load %arg4[%c0_116, %c0_117, %c0_118] : memref<1x1x128xf32, #tpu.memory_space<vmem>>, vector<1x1x128xf32>
    %90 = vector.shape_cast %89 : vector<1x1x128xf32> to vector<1x128xf32>
    %91 = vector.shape_cast %88 : vector<1x128xf32> to vector<1x1x128xf32>
    tpu.vector_store %arg4[%c0_116, %c0_117, %c0_118], %91 {strides = array<i32>} : memref<1x1x128xf32, #tpu.memory_space<vmem>>, vector<1x1x128xf32>,
    %92 = arith.mulf %83, %83 : vector<64x128xf32>
    %cst_119 = arith.constant dense<0.000000e+00> : vector<128xf32>
    %93 = vector.multi_reduction <add>, %92, %cst_119 [0] : vector<64x128xf32> to vector<128xf32>
    %94 = vector.shape_cast %93 : vector<128xf32> to vector<1x128xf32>
    %c0_120 = arith.constant 0 : index
    %c0_121 = arith.constant 0 : index
    %c0_122 = arith.constant 0 : index
    %95 = vector.load %arg5[%c0_120, %c0_121, %c0_122] : memref<1x1x128xf32, #tpu.memory_space<vmem>>, vector<1x1x128xf32>
    %96 = vector.shape_cast %95 : vector<1x1x128xf32> to vector<1x128xf32>
    %97 = vector.shape_cast %94 : vector<1x128xf32> to vector<1x1x128xf32>
    tpu.vector_store %arg5[%c0_120, %c0_121, %c0_122], %97 {strides = array<i32>} : memref<1x1x128xf32, #tpu.memory_space<vmem>>, vector<1x1x128xf32>,
    return
  }
  func.func @transform_0(%arg0: i32) -> (i32, i32, i32, i32, i32) {
    %c0_i32 = arith.constant 0 : i32
    %c0_i32_0 = arith.constant 0 : i32
    %c0_i32_1 = arith.constant 0 : i32
    %c0_i32_2 = arith.constant 0 : i32
    %c0_i32_3 = arith.constant 0 : i32
    return %arg0, %c0_i32, %c0_i32_0, %c0_i32_1, %c0_i32_2 : i32, i32, i32, i32, i32
  }
  func.func @transform_1(%arg0: i32) -> (i32, i32, i32) {
    %c0_i32 = arith.constant 0 : i32
    %c0_i32_0 = arith.constant 0 : i32
    %c0_i32_1 = arith.constant 0 : i32
    %c0_i32_2 = arith.constant 0 : i32
    return %c0_i32, %c0_i32_0, %c0_i32_1 : i32, i32, i32
  }
  func.func @transform_2(%arg0: i32) -> (i32, i32, i32) {
    %c0_i32 = arith.constant 0 : i32
    %c0_i32_0 = arith.constant 0 : i32
    %c0_i32_1 = arith.constant 0 : i32
    return %arg0, %c0_i32, %c0_i32_0 : i32, i32, i32
  }
  func.func @transform_3(%arg0: i32) -> (i32, i32, i32) {
    %c0_i32 = arith.constant 0 : i32
    %c0_i32_0 = arith.constant 0 : i32
    %c0_i32_1 = arith.constant 0 : i32
    return %arg0, %c0_i32, %c0_i32_0 : i32, i32, i32
  }
  func.func @transform_4(%arg0: i32) -> (i32, i32, i32) {
    %c0_i32 = arith.constant 0 : i32
    %c0_i32_0 = arith.constant 0 : i32
    %c0_i32_1 = arith.constant 0 : i32
    return %arg0, %c0_i32, %c0_i32_0 : i32, i32, i32
  }
}

module attributes {stable_mosaic.version = 11 : i64} {
  func.func @_bn_relu_kernel(%arg0: i32, %arg1: memref<128x128xf32, #tpu.memory_space<vmem>>, %arg2: memref<1x128xf32, #tpu.memory_space<vmem>>, %arg3: memref<1x128xf32, #tpu.memory_space<vmem>>, %arg4: memref<128x128xf32, #tpu.memory_space<vmem>>) attributes {dimension_semantics = [#tpu.dimension_semantics<parallel>], iteration_bounds = array<i64: 1>, scalar_prefetch = 0 : i64, scratch_operands = 0 : i64, tpu.core_type = #tpu.core_type<tc>, window_params = [{transform_indices = @transform_0, window_bounds = array<i64: 128, 128>}, {pipeline_mode = #tpu.pipeline_mode<synchronous>, transform_indices = @transform_1, window_bounds = array<i64: 1, 128>}, {pipeline_mode = #tpu.pipeline_mode<synchronous>, transform_indices = @transform_2, window_bounds = array<i64: 1, 128>}, {transform_indices = @transform_3, window_bounds = array<i64: 128, 128>}]} {
    %c0 = arith.constant 0 : index
    %c0_0 = arith.constant 0 : index
    %0 = vector.load %arg1[%c0, %c0_0] : memref<128x128xf32, #tpu.memory_space<vmem>>, vector<128x128xf32>
    %c0_1 = arith.constant 0 : index
    %c0_2 = arith.constant 0 : index
    %1 = vector.load %arg2[%c0_1, %c0_2] : memref<1x128xf32, #tpu.memory_space<vmem>>, vector<1x128xf32>
    %2 = vector.broadcast %1 : vector<1x128xf32> to vector<128x128xf32>
    %3 = arith.mulf %0, %2 : vector<128x128xf32>
    %c0_3 = arith.constant 0 : index
    %c0_4 = arith.constant 0 : index
    %4 = vector.load %arg3[%c0_3, %c0_4] : memref<1x128xf32, #tpu.memory_space<vmem>>, vector<1x128xf32>
    %5 = vector.broadcast %4 : vector<1x128xf32> to vector<128x128xf32>
    %6 = arith.addf %3, %5 : vector<128x128xf32>
    %cst = arith.constant 0.000000e+00 : f32
    %7 = vector.broadcast %cst : f32 to vector<128x128xf32>
    %8 = arith.maximumf %6, %7 : vector<128x128xf32>
    %c0_5 = arith.constant 0 : index
    %c0_6 = arith.constant 0 : index
    %9 = vector.load %arg4[%c0_5, %c0_6] : memref<128x128xf32, #tpu.memory_space<vmem>>, vector<128x128xf32>
    tpu.vector_store %arg4[%c0_5, %c0_6], %8 {strides = array<i32>} : memref<128x128xf32, #tpu.memory_space<vmem>>, vector<128x128xf32>,
    return
  }
  func.func @transform_0(%arg0: i32) -> (i32, i32) {
    %c0_i32 = arith.constant 0 : i32
    %c0_i32_0 = arith.constant 0 : i32
    return %arg0, %c0_i32 : i32, i32
  }
  func.func @transform_1(%arg0: i32) -> (i32, i32) {
    %c0_i32 = arith.constant 0 : i32
    %c0_i32_0 = arith.constant 0 : i32
    %c0_i32_1 = arith.constant 0 : i32
    return %c0_i32, %c0_i32_0 : i32, i32
  }
  func.func @transform_2(%arg0: i32) -> (i32, i32) {
    %c0_i32 = arith.constant 0 : i32
    %c0_i32_0 = arith.constant 0 : i32
    %c0_i32_1 = arith.constant 0 : i32
    return %c0_i32, %c0_i32_0 : i32, i32
  }
  func.func @transform_3(%arg0: i32) -> (i32, i32) {
    %c0_i32 = arith.constant 0 : i32
    %c0_i32_0 = arith.constant 0 : i32
    return %arg0, %c0_i32 : i32, i32
  }
}

</mosaic_0001>

<llo_original>
// kernel: block_forward_nhwc.3
$region0: #{block_forward_nhwc.3}
  #allocation0 [shape = 'u32[]', space=smem, size = 0x4, offset = 0x4, fixed_abs, tag = 'smem constant byte address 0x4 - core index']
  #allocation1 [shape = 'u32[144,128]{1,0:T(1,128)}', space=vmem, size = 0x12000, scoped, tag = 'internal scratch']
  %s0 = inlined_call_operand.vmem [shape: f32[128,128], index: 0, kind: input, shape index: {}]
  %s1 = inlined_call_operand.vmem [shape: f32[1,128], index: 1, kind: input, shape index: {}]
  %s2 = inlined_call_operand.vmem [shape: f32[1,128], index: 2, kind: input, shape index: {}]
  %s3 = inlined_call_operand.hbm [shape: f32[128,128], index: 3, kind: output, shape index: {}]
  %s4 = sld [smem:[#allocation0]]
  $region22: #{block_forward_nhwc.3} parent=0
    _
  %s6 = ssub.s32 1, %s4
  %s7 = scalar_select 0, %s6, %s4
  $region1: #{block_forward_nhwc.3} parent=0
    #allocation2 [shape = 'u8[65536]{0}', space=vmem, size = 0x10000, scoped, tag = 'output window, operand 0, single buffered']
    #allocation3 [shape = 's32[1]{0}', space=sflag, size = 0x4, scoped, tag = 'scoped memory for block_forward_nhwc.3']
    %8 = vsyncpa [#allocation3], 0
    // Predicated region
    $region2: #{block_forward_nhwc.3} parent=1 // pred_check
      _
    $region3: #{block_forward_nhwc.3} parent=1 // pred_check_branch
      %10 = sbr.rel (0) target = $region5
    $region4: #{block_forward_nhwc.3} parent=1 // pred_region
      _
    $region5: #{block_forward_nhwc.3} parent=1 // pred_fallthru
      _
    // Predicated region
    $region6: #{block_forward_nhwc.3} parent=1 // pred_check
      _
    $region7: #{block_forward_nhwc.3} parent=1 // pred_check_branch
      %12 = sbr.rel (0) target = $region9
    $region8: #{block_forward_nhwc.3} parent=1 // pred_region
      _
    $region9: #{block_forward_nhwc.3} parent=1 // pred_fallthru
      _
    // Predicated region
    $region10: #{block_forward_nhwc.3} parent=1 // pred_check
      _
    $region11: #{block_forward_nhwc.3} parent=1 // pred_check_branch
      %14 = sbr.rel (0) target = $region13
    $region12: #{block_forward_nhwc.3} parent=1 // pred_region
      _
    $region13: #{block_forward_nhwc.3} parent=1 // pred_fallthru
      _
    %v15 = vld [vmem:[%s0] sm:$0xff]
    %v16 = vld [vmem:[%s0 + $0x8] sm:$0xff]
    %v17 = vld [vmem:[%s0 + $0x10] sm:$0xff]
    %v18 = vld [vmem:[%s0 + $0x18] sm:$0xff]
    %v19 = vld [vmem:[%s0 + $0x20] sm:$0xff]
    %v20 = vld [vmem:[%s0 + $0x28] sm:$0xff]
    %v21 = vld [vmem:[%s0 + $0x30] sm:$0xff]
    %v22 = vld [vmem:[%s0 + $0x38] sm:$0xff]
    %v23 = vld [vmem:[%s0 + $0x40] sm:$0xff]
    %v24 = vld [vmem:[%s0 + $0x48] sm:$0xff]
    %v25 = vld [vmem:[%s0 + $0x50] sm:$0xff]
    %v26 = vld [vmem:[%s0 + $0x58] sm:$0xff]
    %v27 = vld [vmem:[%s0 + $0x60] sm:$0xff]
    %v28 = vld [vmem:[%s0 + $0x68] sm:$0xff]
    %v29 = vld [vmem:[%s0 + $0x70] sm:$0xff]
    %v30 = vld [vmem:[%s0 + $0x78] sm:$0xff]
    %v31 = vld [vmem:[%s1] sm:$0x1]
    %v33 = vlaneseq
    %v34 = vshrl.u32 %v33, 7
    %v35 = vsub.s32 0, %v34
    %v36 = vrot.slane %v31, %v35
    %v38 = vmul.f32 %v15, %v36
    %v39 = vmul.f32 %v16, %v36
    %v40 = vmul.f32 %v17, %v36
    %v41 = vmul.f32 %v18, %v36
    %v42 = vmul.f32 %v19, %v36
    %v43 = vmul.f32 %v20, %v36
    %v44 = vmul.f32 %v21, %v36
    %v45 = vmul.f32 %v22, %v36
    %v46 = vmul.f32 %v23, %v36
    %v47 = vmul.f32 %v24, %v36
    %v48 = vmul.f32 %v25, %v36
    %v49 = vmul.f32 %v26, %v36
    %v50 = vmul.f32 %v27, %v36
    %v51 = vmul.f32 %v28, %v36
    %v52 = vmul.f32 %v29, %v36
    %v53 = vmul.f32 %v30, %v36
    %v54 = vld [vmem:[%s2] sm:$0x1]
    %v56 = vlaneseq
    %v57 = vshrl.u32 %v56, 7
    %v58 = vsub.s32 0, %v57
    %v59 = vrot.slane %v54, %v58
    %v61 = vadd.f32 %v38, %v59
    %v62 = vadd.f32 %v39, %v59
    %v63 = vadd.f32 %v40, %v59
    %v64 = vadd.f32 %v41, %v59
    %v65 = vadd.f32 %v42, %v59
    %v66 = vadd.f32 %v43, %v59
    %v67 = vadd.f32 %v44, %v59
    %v68 = vadd.f32 %v45, %v59
    %v69 = vadd.f32 %v46, %v59
    %v70 = vadd.f32 %v47, %v59
    %v71 = vadd.f32 %v48, %v59
    %v72 = vadd.f32 %v49, %v59
    %v73 = vadd.f32 %v50, %v59
    %v74 = vadd.f32 %v51, %v59
    %v75 = vadd.f32 %v52, %v59
    %v76 = vadd.f32 %v53, %v59
    %v77 = vmax.f32 %v61, 0.0
    %v78 = vmax.f32 %v62, 0.0
    %v79 = vmax.f32 %v63, 0.0
    %v80 = vmax.f32 %v64, 0.0
    %v81 = vmax.f32 %v65, 0.0
    %v82 = vmax.f32 %v66, 0.0
    %v83 = vmax.f32 %v67, 0.0
    %v84 = vmax.f32 %v68, 0.0
    %v85 = vmax.f32 %v69, 0.0
    %v86 = vmax.f32 %v70, 0.0
    %v87 = vmax.f32 %v71, 0.0
    %v88 = vmax.f32 %v72, 0.0
    %v89 = vmax.f32 %v73, 0.0
    %v90 = vmax.f32 %v74, 0.0
    %v91 = vmax.f32 %v75, 0.0
    %v92 = vmax.f32 %v76, 0.0
    %93 = vst [vmem:[#allocation2] sm:$0xff] %v77
    %94 = vst [vmem:[#allocation2 + $0x8] sm:$0xff] %v78
    %95 = vst [vmem:[#allocation2 + $0x10] sm:$0xff] %v79
    %96 = vst [vmem:[#allocation2 + $0x18] sm:$0xff] %v80
    %97 = vst [vmem:[#allocation2 + $0x20] sm:$0xff] %v81
    %98 = vst [vmem:[#allocation2 + $0x28] sm:$0xff] %v82
    %99 = vst [vmem:[#allocation2 + $0x30] sm:$0xff] %v83
    %100 = vst [vmem:[#allocation2 + $0x38] sm:$0xff] %v84
    %101 = vst [vmem:[#allocation2 + $0x40] sm:$0xff] %v85
    %102 = vst [vmem:[#allocation2 + $0x48] sm:$0xff] %v86
    %103 = vst [vmem:[#allocation2 + $0x50] sm:$0xff] %v87
    %104 = vst [vmem:[#allocation2 + $0x58] sm:$0xff] %v88
    %105 = vst [vmem:[#allocation2 + $0x60] sm:$0xff] %v89
    %106 = vst [vmem:[#allocation2 + $0x68] sm:$0xff] %v90
    %107 = vst [vmem:[#allocation2 + $0x70] sm:$0xff] %v91
    %108 = vst [vmem:[#allocation2 + $0x78] sm:$0xff] %v92
    // Predicated region
    $region14: #{block_forward_nhwc.3} parent=1 // pred_check
      _
    $region15: #{block_forward_nhwc.3} parent=1 // pred_check_branch
      %110 = sbr.rel (0) target = $region17
    $region16: #{block_forward_nhwc.3} parent=1 // pred_region
      %s112 = ssub.s32 2048, 2048
      %113 = vsyncadd [#allocation3], %s112
      %s114 = sshll.u32 [#allocation2], 4
      %s115 = int_to_ptr.vmem [resolvable:$true] %s114
      %120 = dma.vmem_to_hbm [thread:$0]  %s115, 2048, %s3, [#allocation3], 128, 128, 8
    $region17: #{block_forward_nhwc.3} parent=1 // pred_fallthru
      _
    // Predicated region
    $region18: #{block_forward_nhwc.3} parent=1 // pred_check
      _
    $region19: #{block_forward_nhwc.3} parent=1 // pred_check_branch
      %122 = sbr.rel (0) target = $region21
    $region20: #{block_forward_nhwc.3} parent=1 // pred_region
      %123 = dma.done [#allocation3], 2048
    $region21: #{block_forward_nhwc.3} parent=1 // pred_fallthru
      _
    %124 = vsyncpa [#allocation3], 1

// kernel: block_forward_nhwc.2
$region0: #{block_forward_nhwc.2}
  #allocation0 [shape = 'u32[]', space=smem, size = 0x4, offset = 0x4, fixed_abs, tag = 'smem constant byte address 0x4 - core index']
  #allocation1 [shape = 'u32[144,128]{1,0:T(1,128)}', space=vmem, size = 0x12000, scoped, tag = 'internal scratch']
  #allocation2 [shape = 'f32[64,128]{1,0:T(8,128)}', space=vmem, size = 0x8000, scoped, tag = 'scratch operand']
  %s0 = inlined_call_operand.vmem [shape: bf16[2,4,9,9,8], index: 0, kind: input, shape index: {}]
  %s1 = inlined_call_operand.vmem [shape: bf16[9,8,128], index: 1, kind: input, shape index: {}]
  %s2 = inlined_call_operand.vmem [shape: f32[2,64,128], index: 2, kind: output, shape index: {0}]
  %s3 = inlined_call_operand.vmem [shape: f32[2,1,128], index: 3, kind: output, shape index: {1}]
  %s4 = inlined_call_operand.vmem [shape: f32[2,1,128], index: 4, kind: output, shape index: {2}]
  %5 = xla_tuple %s2, %s3, %s4
  %s6 = sld [smem:[#allocation0]]
  $region57: #{block_forward_nhwc.2} parent=0
    _
  %s8 = ssub.s32 1, %s6
  %s9 = scalar_select 0, %s8, %s6
  loop: start=0, step=1, limit=4
  $region2: #{block_forward_nhwc.2} parent=0 // loop_pre_header
    _
  $region3: #{block_forward_nhwc.2} parent=0 // loop_header
    %s11 = sphi 0, %s15
    %p12 = scmp.ge.s32.totalorder %s11, 4
    %s21 = sphi 0, %s23
    %s24 = sphi 0, %s21
    %s25 = sphi 0, %s24
    %s41 = sphi 0, %s25
    %s45 = sphi 0, %s45
    %s47 = sphi 0, %s45
    %s48 = sphi 0, %s47
    %s62 = sphi 0, %s48
    %s68 = sphi 0, %s70
    %s71 = sphi 0, %s68
    %s72 = sphi 0, %s71
    %s88 = sphi 0, %s72
    %s94 = sphi 0, %s96
    %s97 = sphi 0, %s94
    %s98 = sphi 0, %s97
    %s114 = sphi 0, %s98
    %s120 = sphi 0, %s122
    %s123 = sphi 0, %s120
    %s124 = sphi 0, %s123
    %s140 = sphi 0, %s124
  $region4: #{block_forward_nhwc.2} parent=0 // loop_header_branch
    %14 = sbr.rel (%p12) target = $region8
  $region5: #{block_forward_nhwc.2} parent=0 // loop_body
    %s16 = ssub.s32 %s11, 1
    %s17 = ssub.s32 %s11, 2
    %s18 = sadd.s32 %s11, 1
    %s19 = ssub.s32 %s11, %s18
    %p20 = scmp.eq.s32.totalorder %s19, 0
    %s22 = sadd.s32 %s21, 1
    %s23 = scalar_select %p20, %s21, %s22
    %p26 = pneg %p20
    %p27 = scmp.eq.s32.totalorder %s11, 1
    %p28 = por %p26, %p27
    %p29 = scmp.ne.s32.totalorder %s21, %s24
    %p30 = scmp.eq.s32.totalorder %s11, 0
    %p31 = por %p29, %p30
    %p32 = scmp.ne.s32.totalorder %s21, %s24
    %p33 = scmp.eq.s32.totalorder %s16, 1
    %p34 = por %p32, %p33
    %p35 = scmp.ne.s32.totalorder %s24, %s25
    %p36 = scmp.eq.s32.totalorder %s16, 0
    %p37 = por %p35, %p36
    %p38 = scmp.ne.s32.totalorder %s24, %s25
    %p39 = scmp.eq.s32.totalorder %s17, 1
    %p40 = por %p38, %p39
    %p42 = scmp.ne.s32.totalorder %s25, %s41
    %p43 = scmp.eq.s32.totalorder %s17, 0
    %p44 = por %p42, %p43
    %s46 = sadd.s32 %s45, 1
    %p49 = scmp.eq.s32.totalorder %s11, 1
    %p50 = scmp.ne.s32.totalorder %s45, %s47
    %p51 = scmp.eq.s32.totalorder %s11, 0
    %p52 = por %p50, %p51
    %p53 = scmp.ne.s32.totalorder %s45, %s47
    %p54 = scmp.eq.s32.totalorder %s16, 1
    %p55 = por %p53, %p54
    %p56 = scmp.ne.s32.totalorder %s47, %s48
    %p57 = scmp.eq.s32.totalorder %s16, 0
    %p58 = por %p56, %p57
    %p59 = scmp.ne.s32.totalorder %s47, %s48
    %p60 = scmp.eq.s32.totalorder %s17, 1
    %p61 = por %p59, %p60
    %p63 = scmp.ne.s32.totalorder %s48, %s62
    %p64 = scmp.eq.s32.totalorder %s17, 0
    %p65 = por %p63, %p64
    %s66 = ssub.s32 %s11, %s18
    %p67 = scmp.eq.s32.totalorder %s66, 0
    %s69 = sadd.s32 %s68, 1
    %s70 = scalar_select %p67, %s68, %s69
    %p73 = pneg %p67
    %p74 = scmp.eq.s32.totalorder %s11, 1
    %p75 = por %p73, %p74
    %p76 = scmp.ne.s32.totalorder %s68, %s71
    %p77 = scmp.eq.s32.totalorder %s11, 0
    %p78 = por %p76, %p77
    %p79 = scmp.ne.s32.totalorder %s68, %s71
    %p80 = scmp.eq.s32.totalorder %s16, 1
    %p81 = por %p79, %p80
    %p82 = scmp.ne.s32.totalorder %s71, %s72
    %p83 = scmp.eq.s32.totalorder %s16, 0
    %p84 = por %p82, %p83
    %p85 = scmp.ne.s32.totalorder %s71, %s72
    %p86 = scmp.eq.s32.totalorder %s17, 1
    %p87 = por %p85, %p86
    %p89 = scmp.ne.s32.totalorder %s72, %s88
    %p90 = scmp.eq.s32.totalorder %s17, 0
    %p91 = por %p89, %p90
    %s92 = ssub.s32 %s11, %s18
    %p93 = scmp.eq.s32.totalorder %s92, 0
    %s95 = sadd.s32 %s94, 1
    %s96 = scalar_select %p93, %s94, %s95
    %p99 = pneg %p93
    %p100 = scmp.eq.s32.totalorder %s11, 1
    %p101 = por %p99, %p100
    %p102 = scmp.ne.s32.totalorder %s94, %s97
    %p103 = scmp.eq.s32.totalorder %s11, 0
    %p104 = por %p102, %p103
    %p105 = scmp.ne.s32.totalorder %s94, %s97
    %p106 = scmp.eq.s32.totalorder %s16, 1
    %p107 = por %p105, %p106
    %p108 = scmp.ne.s32.totalorder %s97, %s98
    %p109 = scmp.eq.s32.totalorder %s16, 0
    %p110 = por %p108, %p109
    %p111 = scmp.ne.s32.totalorder %s97, %s98
    %p112 = scmp.eq.s32.totalorder %s17, 1
    %p113 = por %p111, %p112
    %p115 = scmp.ne.s32.totalorder %s98, %s114
    %p116 = scmp.eq.s32.totalorder %s17, 0
    %p117 = por %p115, %p116
    %s118 = ssub.s32 %s11, %s18
    %p119 = scmp.eq.s32.totalorder %s118, 0
    %s121 = sadd.s32 %s120, 1
    %s122 = scalar_select %p119, %s120, %s121
    %p125 = pneg %p119
    %p126 = scmp.eq.s32.totalorder %s11, 1
    %p127 = por %p125, %p126
    %p128 = scmp.ne.s32.totalorder %s120, %s123
    %p129 = scmp.eq.s32.totalorder %s11, 0
    %p130 = por %p128, %p129
    %p131 = scmp.ne.s32.totalorder %s120, %s123
    %p132 = scmp.eq.s32.totalorder %s16, 1
    %p133 = por %p131, %p132
    %p134 = scmp.ne.s32.totalorder %s123, %s124
    %p135 = scmp.eq.s32.totalorder %s16, 0
    %p136 = por %p134, %p135
    %p137 = scmp.ne.s32.totalorder %s123, %s124
    %p138 = scmp.eq.s32.totalorder %s17, 1
    %p139 = por %p137, %p138
    %p141 = scmp.ne.s32.totalorder %s124, %s140
    %p142 = scmp.eq.s32.totalorder %s17, 0
    %p143 = por %p141, %p142
    %p144 = scmp.le.s32.totalorder 1, %s11
    %p145 = scmp.lt.s32.totalorder %s11, 3
    %p146 = pnand %p144, %p145
    %p147 = pneg %p146
    // Predicated region
    $region9: #{block_forward_nhwc.2} parent=5 // pred_check
      _
    $region10: #{block_forward_nhwc.2} parent=5 // pred_check_branch
      %149 = sbr.rel (%p146) target = $region12
    $region11: #{block_forward_nhwc.2} parent=5 // pred_region
      %s150 = ssub.s32 %s11, 1
      // Predicated region
      $region13: #{block_forward_nhwc.2} parent=11 // pred_check
        %p151 = pneg %p58
      $region14: #{block_forward_nhwc.2} parent=11 // pred_check_branch
        %153 = sbr.rel (%p151) target = $region16
      $region15: #{block_forward_nhwc.2} parent=11 // pred_region
        _
      $region16: #{block_forward_nhwc.2} parent=11 // pred_fallthru
        _
    $region12: #{block_forward_nhwc.2} parent=5 // pred_fallthru
      _
    %p154 = scmp.lt.s32.totalorder %s11, 2
    // Predicated region
    $region17: #{block_forward_nhwc.2} parent=5 // pred_check
      %p155 = pneg %p154
    $region18: #{block_forward_nhwc.2} parent=5 // pred_check_branch
      %157 = sbr.rel (%p155) target = $region20
    $region19: #{block_forward_nhwc.2} parent=5 // pred_region
      // Predicated region
      $region21: #{block_forward_nhwc.2} parent=19 // pred_check
        %p158 = pneg %p31
      $region22: #{block_forward_nhwc.2} parent=19 // pred_check_branch
        %160 = sbr.rel (%p158) target = $region24
      $region23: #{block_forward_nhwc.2} parent=19 // pred_region
        %p161 = scmp.lt.s32.totalorder %s11, 1
        %s162 = scalar_select %p161, %s11, 1
        %s163 = smul.addr %s162, 72
        %s164 = smul.addr %s163, 4
        %s165 = scalar_lea.vmem %s0, %s164
      $region24: #{block_forward_nhwc.2} parent=19 // pred_fallthru
        _
    $region20: #{block_forward_nhwc.2} parent=5 // pred_fallthru
      _
    %p166 = scmp.le.s32.totalorder 1, %s11
    %p167 = scmp.lt.s32.totalorder %s11, 3
    %p168 = pnand %p166, %p167
    %p169 = pneg %p168
    // Predicated region
    $region25: #{block_forward_nhwc.2} parent=5 // pred_check
      _
    $region26: #{block_forward_nhwc.2} parent=5 // pred_check_branch
      %171 = sbr.rel (%p168) target = $region28
    $region27: #{block_forward_nhwc.2} parent=5 // pred_region
      %s172 = ssub.s32 %s11, 1
      %p173 = scmp.lt.s32.totalorder %s16, 1
      %s174 = scalar_select %p173, %s16, 1
      %s175 = smul.addr %s174, 72
      %s176 = smul.addr %s175, 4
      %s177 = scalar_lea.vmem %s0, %s176
      %p178 = pneg %p37
      %p179 = pneg %p34
      %p180 = pneg %p58
      %p181 = pneg %p55
      %p182 = pneg %p84
      %p183 = pneg %p81
      %p184 = scmp.lt.s32.totalorder %s16, 1
      %s185 = scalar_select %p184, %s16, 1
      %s186 = smul.addr %s185, 8
      %s187 = smul.addr %s186, 8
      %s188 = scalar_lea.vmem %s2, %s187
      %p189 = pneg %p110
      %p190 = pneg %p107
      %p191 = scmp.lt.s32.totalorder %s16, 1
      %s192 = scalar_select %p191, %s16, 1
      %s193 = scalar_lea.vmem %s3, %s192
      %p194 = pneg %p136
      %p195 = pneg %p133
      %p196 = scmp.lt.s32.totalorder %s16, 1
      %s197 = scalar_select %p196, %s16, 1
      %s198 = scalar_lea.vmem %s4, %s197
      %p199 = scmp.lt.s32.totalorder %s16, 1
      %s200 = scalar_select %p199, %s16, 1
      %s201 = smul.addr %s200, 72
      %s202 = smul.addr %s201, 4
      %s203 = scalar_lea.vmem %s0, %s202
      %p204 = scmp.lt.s32.totalorder %s16, 1
      %s205 = scalar_select %p204, %s16, 1
      %s206 = smul.addr %s205, 8
      %s207 = smul.addr %s206, 8
      %s208 = scalar_lea.vmem %s2, %s207
      %p209 = scmp.lt.s32.totalorder %s16, 1
      %s210 = scalar_select %p209, %s16, 1
      %s211 = scalar_lea.vmem %s3, %s210
      %p212 = scmp.lt.s32.totalorder %s16, 1
      %s213 = scalar_select %p212, %s16, 1
      %s214 = scalar_lea.vmem %s4, %s213
      %216 = vst [vmem:[#allocation2] sm:$0xff] 0.0
      %217 = vst [vmem:[#allocation2 + $0x8] sm:$0xff] 0.0
      %218 = vst [vmem:[#allocation2 + $0x10] sm:$0xff] 0.0
      %219 = vst [vmem:[#allocation2 + $0x18] sm:$0xff] 0.0
      %220 = vst [vmem:[#allocation2 + $0x20] sm:$0xff] 0.0
      %221 = vst [vmem:[#allocation2 + $0x28] sm:$0xff] 0.0
      %222 = vst [vmem:[#allocation2 + $0x30] sm:$0xff] 0.0
      %223 = vst [vmem:[#allocation2 + $0x38] sm:$0xff] 0.0
      %v224 = vld [vmem:[%s203] sm:$0xf]
      %v225 = vld [vmem:[%s203 + $0x8] sm:$0xf]
      %v226 = vld [vmem:[%s203 + $0x10] sm:$0xf]
      %v227 = vld [vmem:[%s203 + $0x18] sm:$0xf]
      %v228 = vld [vmem:[%s203 + $0x20] sm:$0xf]
      %v229 = vld [vmem:[%s203 + $0x28] sm:$0xf]
      %v230 = vld [vmem:[%s203 + $0x30] sm:$0xf]
      %v231 = vld [vmem:[%s203 + $0x38] sm:$0xf]
      %v232 = vld [vmem:[#allocation2] sm:$0xff]
      %v233 = vld [vmem:[#allocation2 + $0x8] sm:$0xff]
      %v234 = vld [vmem:[#allocation2 + $0x10] sm:$0xff]
      %v235 = vld [vmem:[#allocation2 + $0x18] sm:$0xff]
      %v236 = vld [vmem:[#allocation2 + $0x20] sm:$0xff]
      %v237 = vld [vmem:[#allocation2 + $0x28] sm:$0xff]
      %v238 = vld [vmem:[#allocation2 + $0x30] sm:$0xff]
      %v239 = vld [vmem:[#allocation2 + $0x38] sm:$0xff]
      %v240 = vld [vmem:[%s1] sm:$0xf]
      %v249 = vunpack.c.l.b16 %v224
      %v250 = vunpack.c.l.b16 %v225
      %v251 = vunpack.c.l.b16 %v226
      %v252 = vunpack.c.l.b16 %v227
      %v253 = vunpack.c.l.b16 %v228
      %v254 = vunpack.c.l.b16 %v229
      %v255 = vunpack.c.l.b16 %v230
      %v256 = vunpack.c.l.b16 %v231
      %v257 = vpack.c.b16 %v250, %v249
      %v258 = vpack.c.b16 %v252, %v251
      %v259 = vpack.c.b16 %v254, %v253
      %v260 = vpack.c.b16 %v256, %v255
      %vm261 = vcmask 64512
      %v263 = vsel %vm261, %v257, 0
      %v266 = vsel %vm261, %v258, 0
      %v269 = vsel %vm261, %v259, 0
      %v272 = vsel %vm261, %v260, 0
      %vm274 = vcmask 1043456
      %v276 = vsel %vm274, %v240, 0
      %278 = vmatprep.subr.bf16.mxu0 0
      %279 = vmatpush1.bf16.msra.mxu0 %v276
      %280 = vmatprep.subr.bf16.mxu0 0
      %281 = vmatpush1.bf16.msra.mxu0 0
      %282 = vmatprep.subr.bf16.mxu0 0
      %283 = vmatpush1.bf16.msra.mxu0 0
      %284 = vmatprep.subr.bf16.mxu0 0
      %285 = vmatpush1.bf16.msra.mxu0 0
      %286 = vmatprep.subr.bf16.mxu0 0
      %287 = vmatpush1.bf16.msra.mxu0 0
      %288 = vmatprep.subr.bf16.mxu0 0
      %289 = vmatpush1.bf16.msra.mxu0 0
      %290 = vmatprep.subr.bf16.mxu0 0
      %291 = vmatpush1.bf16.msra.mxu0 0
      %292 = vmatprep.subr.bf16.mxu0 0
      %293 = vmatpush1.bf16.msra.mxu0 0
      %294 = vmatprep.subr.bf16.mxu0 0
      %295 = vmatpush1.bf16.msra.mxu0 0
      %296 = vmatprep.subr.bf16.mxu0 0
      %297 = vmatpush1.bf16.msra.mxu0 0
      %298 = vmatprep.subr.bf16.mxu0 0
      %299 = vmatpush1.bf16.msra.mxu0 0
      %300 = vmatprep.subr.bf16.mxu0 0
      %301 = vmatpush1.bf16.msra.mxu0 0
      %302 = vmatprep.subr.bf16.mxu0 0
      %303 = vmatpush1.bf16.msra.mxu0 0
      %304 = vmatprep.subr.bf16.mxu0 0
      %305 = vmatpush1.bf16.msra.mxu0 0
      %306 = vmatprep.subr.bf16.mxu0 0
      %307 = vmatpush1.bf16.msra.mxu0 0
      %308 = vmatprep.subr.bf16.mxu0 0
      %309 = vmatpush1.bf16.msra.mxu0 0
      %310 = vmatprep.mubr.bf16.mxu0 0
      %311 = vmatmul.mubr.bf16.gmra.mrb[0].mxu0 %v263
      %v312 = vpop.f32.mrb[0].mxu0
      %v313 = vadd.f32 0.0, %v312
      %v314 = vpop.f32.mrb[0].mxu0
      %v315 = vpop.f32.mrb[0].mxu0
      %v316 = vadd.f32 0.0, %v315
      %v317 = vpop.f32.mrb[0].mxu0
      %318 = vmatprep.mubr.bf16.mxu0 0
      %319 = vmatmul.mubr.bf16.gmra.mrb[0].mxu0 %v266
      %v320 = vpop.f32.mrb[0].mxu0
      %v321 = vadd.f32 0.0, %v320
      %v322 = vpop.f32.mrb[0].mxu0
      %v323 = vpop.f32.mrb[0].mxu0
      %v324 = vadd.f32 0.0, %v323
      %v325 = vpop.f32.mrb[0].mxu0
      %326 = vmatprep.mubr.bf16.mxu0 0
      %327 = vmatmul.mubr.bf16.gmra.mrb[0].mxu0 %v269
      %v328 = vpop.f32.mrb[0].mxu0
      %v329 = vadd.f32 0.0, %v328
      %v330 = vpop.f32.mrb[0].mxu0
      %v331 = vpop.f32.mrb[0].mxu0
      %v332 = vadd.f32 0.0, %v331
      %v333 = vpop.f32.mrb[0].mxu0
      %334 = vmatprep.mubr.bf16.mxu0 0
      %335 = vmatmul.mubr.bf16.gmra.mrb[0].mxu0 %v272
      %v336 = vpop.f32.mrb[0].mxu0
      %v337 = vadd.f32 0.0, %v336
      %v338 = vpop.f32.mrb[0].mxu0
      %v339 = vpop.f32.mrb[0].mxu0
      %v340 = vadd.f32 0.0, %v339
      %v341 = vpop.f32.mrb[0].mxu0
      %342 = vdwg.mxu0
      %v343 = vadd.f32 %v232, %v313
      %v344 = vadd.f32 %v233, %v316
      %v345 = vadd.f32 %v234, %v321
      %v346 = vadd.f32 %v235, %v324
      %v347 = vadd.f32 %v236, %v329
      %v348 = vadd.f32 %v237, %v332
      %v349 = vadd.f32 %v238, %v337
      %v350 = vadd.f32 %v239, %v340
      %351 = vst [vmem:[#allocation2] sm:$0xff] %v343
      %352 = vst [vmem:[#allocation2 + $0x8] sm:$0xff] %v344
      %353 = vst [vmem:[#allocation2 + $0x10] sm:$0xff] %v345
      %354 = vst [vmem:[#allocation2 + $0x18] sm:$0xff] %v346
      %355 = vst [vmem:[#allocation2 + $0x20] sm:$0xff] %v347
      %356 = vst [vmem:[#allocation2 + $0x28] sm:$0xff] %v348
      %357 = vst [vmem:[#allocation2 + $0x30] sm:$0xff] %v349
      %358 = vst [vmem:[#allocation2 + $0x38] sm:$0xff] %v350
      %s359 = scalar_lea.vmem %s203, 72
      %v360 = vld [vmem:[%s359] sm:$0xf]
      %v361 = vld [vmem:[%s359 + $0x8] sm:$0xf]
      %v362 = vld [vmem:[%s359 + $0x10] sm:$0xf]
      %v363 = vld [vmem:[%s359 + $0x18] sm:$0xf]
      %v364 = vld [vmem:[%s359 + $0x20] sm:$0xf]
      %v365 = vld [vmem:[%s359 + $0x28] sm:$0xf]
      %v366 = vld [vmem:[%s359 + $0x30] sm:$0xf]
      %v367 = vld [vmem:[%s359 + $0x38] sm:$0xf]
      %v368 = vld [vmem:[#allocation2] sm:$0xff]
      %v369 = vld [vmem:[#allocation2 + $0x8] sm:$0xff]
      %v370 = vld [vmem:[#allocation2 + $0x10] sm:$0xff]
      %v371 = vld [vmem:[#allocation2 + $0x18] sm:$0xff]
      %v372 = vld [vmem:[#allocation2 + $0x20] sm:$0xff]
      %v373 = vld [vmem:[#allocation2 + $0x28] sm:$0xff]
      %v374 = vld [vmem:[#allocation2 + $0x30] sm:$0xff]
      %v375 = vld [vmem:[#allocation2 + $0x38] sm:$0xff]
      %s376 = scalar_lea.vmem %s1, 4
      %v377 = vld [vmem:[%s376] sm:$0xf]
      %v386 = vunpack.c.l.b16 %v360
      %v387 = vunpack.c.l.b16 %v361
      %v388 = vunpack.c.l.b16 %v362
      %v389 = vunpack.c.l.b16 %v363
      %v390 = vunpack.c.l.b16 %v364
      %v391 = vunpack.c.l.b16 %v365
      %v392 = vunpack.c.l.b16 %v366
      %v393 = vunpack.c.l.b16 %v367
      %v394 = vpack.c.b16 %v387, %v386
      %v395 = vpack.c.b16 %v389, %v388
      %v396 = vpack.c.b16 %v391, %v390
      %v397 = vpack.c.b16 %v393, %v392
      %v399 = vsel %vm261, %v394, 0
      %v402 = vsel %vm261, %v395, 0
      %v405 = vsel %vm261, %v396, 0
      %v408 = vsel %vm261, %v397, 0
      %v411 = vsel %vm274, %v377, 0
      %413 = vmatprep.subr.bf16.mxu0 0
      %414 = vmatpush1.bf16.msra.mxu0 %v411
      %415 = vmatprep.subr.bf16.mxu0 0
      %416 = vmatpush1.bf16.msra.mxu0 0
      %417 = vmatprep.subr.bf16.mxu0 0
      %418 = vmatpush1.bf16.msra.mxu0 0
      %419 = vmatprep.subr.bf16.mxu0 0
      %420 = vmatpush1.bf16.msra.mxu0 0
      %421 = vmatprep.subr.bf16.mxu0 0
      %422 = vmatpush1.bf16.msra.mxu0 0
      %423 = vmatprep.subr.bf16.mxu0 0
      %424 = vmatpush1.bf16.msra.mxu0 0
      %425 = vmatprep.subr.bf16.mxu0 0
      %426 = vmatpush1.bf16.msra.mxu0 0
      %427 = vmatprep.subr.bf16.mxu0 0
      %428 = vmatpush1.bf16.msra.mxu0 0
      %429 = vmatprep.subr.bf16.mxu0 0
      %430 = vmatpush1.bf16.msra.mxu0 0
      %431 = vmatprep.subr.bf16.mxu0 0
      %432 = vmatpush1.bf16.msra.mxu0 0
      %433 = vmatprep.subr.bf16.mxu0 0
      %434 = vmatpush1.bf16.msra.mxu0 0
      %435 = vmatprep.subr.bf16.mxu0 0
      %436 = vmatpush1.bf16.msra.mxu0 0
      %437 = vmatprep.subr.bf16.mxu0 0
      %438 = vmatpush1.bf16.msra.mxu0 0
      %439 = vmatprep.subr.bf16.mxu0 0
      %440 = vmatpush1.bf16.msra.mxu0 0
      %441 = vmatprep.subr.bf16.mxu0 0
      %442 = vmatpush1.bf16.msra.mxu0 0
      %443 = vmatprep.subr.bf16.mxu0 0
      %444 = vmatpush1.bf16.msra.mxu0 0
      %445 = vmatprep.mubr.bf16.mxu0 0
      %446 = vmatmul.mubr.bf16.gmra.mrb[0].mxu0 %v399
      %v447 = vpop.f32.mrb[0].mxu0
      %v448 = vadd.f32 0.0, %v447
      %v449 = vpop.f32.mrb[0].mxu0
      %v450 = vpop.f32.mrb[0].mxu0
      %v451 = vadd.f32 0.0, %v450
      %v452 = vpop.f32.mrb[0].mxu0
      %453 = vmatprep.mubr.bf16.mxu0 0
      %454 = vmatmul.mubr.bf16.gmra.mrb[0].mxu0 %v402
      %v455 = vpop.f32.mrb[0].mxu0
      %v456 = vadd.f32 0.0, %v455
      %v457 = vpop.f32.mrb[0].mxu0
      %v458 = vpop.f32.mrb[0].mxu0
      %v459 = vadd.f32 0.0, %v458
      %v460 = vpop.f32.mrb[0].mxu0
      %461 = vmatprep.mubr.bf16.mxu0 0
      %462 = vmatmul.mubr.bf16.gmra.mrb[0].mxu0 %v405
      %v463 = vpop.f32.mrb[0].mxu0
      %v464 = vadd.f32 0.0, %v463
      %v465 = vpop.f32.mrb[0].mxu0
      %v466 = vpop.f32.mrb[0].mxu0
      %v467 = vadd.f32 0.0, %v466
      %v468 = vpop.f32.mrb[0].mxu0
      %469 = vmatprep.mubr.bf16.mxu0 0
      %470 = vmatmul.mubr.bf16.gmra.mrb[0].mxu0 %v408
      %v471 = vpop.f32.mrb[0].mxu0
      %v472 = vadd.f32 0.0, %v471
      %v473 = vpop.f32.mrb[0].mxu0
      %v474 = vpop.f32.mrb[0].mxu0
      %v475 = vadd.f32 0.0, %v474
      %v476 = vpop.f32.mrb[0].mxu0
      %477 = vdwg.mxu0
      %v478 = vadd.f32 %v368, %v448
      %v479 = vadd.f32 %v369, %v451
      %v480 = vadd.f32 %v370, %v456
      %v481 = vadd.f32 %v371, %v459
      %v482 = vadd.f32 %v372, %v464
      %v483 = vadd.f32 %v373, %v467
      %v484 = vadd.f32 %v374, %v472
      %v485 = vadd.f32 %v375, %v475
      %486 = vst [vmem:[#allocation2] sm:$0xff] %v478
      %487 = vst [vmem:[#allocation2 + $0x8] sm:$0xff] %v479
      %488 = vst [vmem:[#allocation2 + $0x10] sm:$0xff] %v480
      %489 = vst [vmem:[#allocation2 + $0x18] sm:$0xff] %v481
      %490 = vst [vmem:[#allocation2 + $0x20] sm:$0xff] %v482
      %491 = vst [vmem:[#allocation2 + $0x28] sm:$0xff] %v483
      %492 = vst [vmem:[#allocation2 + $0x30] sm:$0xff] %v484
      %493 = vst [vmem:[#allocation2 + $0x38] sm:$0xff] %v485
      %v494 = vld [vmem:[%s203] sm:$0xf]
      %v495 = vld [vmem:[%s203 + $0x4] sm:$0x1]
      %v496 = vld [vmem:[%s203 + $0x8] sm:$0xf]
      %v497 = vld [vmem:[%s203 + $0xc] sm:$0x1]
      %v498 = vld [vmem:[%s203 + $0x10] sm:$0xf]
      %v499 = vld [vmem:[%s203 + $0x14] sm:$0x1]
      %v500 = vld [vmem:[%s203 + $0x18] sm:$0xf]
      %v501 = vld [vmem:[%s203 + $0x1c] sm:$0x1]
      %v502 = vld [vmem:[%s203 + $0x20] sm:$0xf]
      %v503 = vld [vmem:[%s203 + $0x24] sm:$0x1]
      %v504 = vld [vmem:[%s203 + $0x28] sm:$0xf]
      %v505 = vld [vmem:[%s203 + $0x2c] sm:$0x1]
      %v506 = vld [vmem:[%s203 + $0x30] sm:$0xf]
      %v507 = vld [vmem:[%s203 + $0x34] sm:$0x1]
      %v508 = vld [vmem:[%s203 + $0x38] sm:$0xf]
      %v509 = vld [vmem:[%s203 + $0x3c] sm:$0x1]
      %vm510 = vsmask.f32 3328
      %vm511 = vsmask.f32 7440
      %vm512 = vmor %vm510, %vm511
      %v514 = vshrl.u32 %v494, 16
      %v516 = vrot.slane %v514, 4
      %v517 = vshll.u32 %v494, 16
      %v519 = vrot.slane %v517, 5
      %v520 = vor.u32 %v516, %v519
      %v521 = vrot.slane %v520, 4
      %v523 = vshll.u32 %v495, 16
      %v525 = vrot.slane %v523, 5
      %v526 = vsel %vm512, %v521, %v525
      %v528 = vshrl.u32 %v496, 16
      %v530 = vrot.slane %v528, 4
      %v531 = vshll.u32 %v496, 16
      %v533 = vrot.slane %v531, 5
      %v534 = vor.u32 %v530, %v533
      %v535 = vrot.slane %v534, 4
      %v537 = vshll.u32 %v497, 16
      %v539 = vrot.slane %v537, 5
      %v540 = vsel %vm512, %v535, %v539
      %v542 = vshrl.u32 %v498, 16
      %v544 = vrot.slane %v542, 4
      %v545 = vshll.u32 %v498, 16
      %v547 = vrot.slane %v545, 5
      %v548 = vor.u32 %v544, %v547
      %v549 = vrot.slane %v548, 4
      %v551 = vshll.u32 %v499, 16
      %v553 = vrot.slane %v551, 5
      %v554 = vsel %vm512, %v549, %v553
      %v556 = vshrl.u32 %v500, 16
      %v558 = vrot.slane %v556, 4
      %v559 = vshll.u32 %v500, 16
      %v561 = vrot.slane %v559, 5
      %v562 = vor.u32 %v558, %v561
      %v563 = vrot.slane %v562, 4
      %v565 = vshll.u32 %v501, 16
      %v567 = vrot.slane %v565, 5
      %v568 = vsel %vm512, %v563, %v567
      %v570 = vshrl.u32 %v502, 16
      %v572 = vrot.slane %v570, 4
      %v573 = vshll.u32 %v502, 16
      %v575 = vrot.slane %v573, 5
      %v576 = vor.u32 %v572, %v575
      %v577 = vrot.slane %v576, 4
      %v579 = vshll.u32 %v503, 16
      %v581 = vrot.slane %v579, 5
      %v582 = vsel %vm512, %v577, %v581
      %v584 = vshrl.u32 %v504, 16
      %v586 = vrot.slane %v584, 4
      %v587 = vshll.u32 %v504, 16
      %v589 = vrot.slane %v587, 5
      %v590 = vor.u32 %v586, %v589
      %v591 = vrot.slane %v590, 4
      %v593 = vshll.u32 %v505, 16
      %v595 = vrot.slane %v593, 5
      %v596 = vsel %vm512, %v591, %v595
      %v598 = vshrl.u32 %v506, 16
      %v600 = vrot.slane %v598, 4
      %v601 = vshll.u32 %v506, 16
      %v603 = vrot.slane %v601, 5
      %v604 = vor.u32 %v600, %v603
      %v605 = vrot.slane %v604, 4
      %v607 = vshll.u32 %v507, 16
      %v609 = vrot.slane %v607, 5
      %v610 = vsel %vm512, %v605, %v609
      %v612 = vshrl.u32 %v508, 16
      %v614 = vrot.slane %v612, 4
      %v615 = vshll.u32 %v508, 16
      %v617 = vrot.slane %v615, 5
      %v618 = vor.u32 %v614, %v617
      %v619 = vrot.slane %v618, 4
      %v621 = vshll.u32 %v509, 16
      %v623 = vrot.slane %v621, 5
      %v624 = vsel %vm512, %v619, %v623
      %v625 = vld [vmem:[#allocation2] sm:$0xff]
      %v626 = vld [vmem:[#allocation2 + $0x8] sm:$0xff]
      %v627 = vld [vmem:[#allocation2 + $0x10] sm:$0xff]
      %v628 = vld [vmem:[#allocation2 + $0x18] sm:$0xff]
      %v629 = vld [vmem:[#allocation2 + $0x20] sm:$0xff]
      %v630 = vld [vmem:[#allocation2 + $0x28] sm:$0xff]
      %v631 = vld [vmem:[#allocation2 + $0x30] sm:$0xff]
      %v632 = vld [vmem:[#allocation2 + $0x38] sm:$0xff]
      %s633 = scalar_lea.vmem %s1, 8
      %v634 = vld [vmem:[%s633] sm:$0xf]
      %v635 = vunpack.c.l.b16 %v526
      %v636 = vunpack.c.l.b16 %v540
      %v637 = vunpack.c.l.b16 %v554
      %v638 = vunpack.c.l.b16 %v568
      %v639 = vunpack.c.l.b16 %v582
      %v640 = vunpack.c.l.b16 %v596
      %v641 = vunpack.c.l.b16 %v610
      %v642 = vunpack.c.l.b16 %v624
      %v643 = vpack.c.b16 %v636, %v635
      %v644 = vpack.c.b16 %v638, %v637
      %v645 = vpack.c.b16 %v640, %v639
      %v646 = vpack.c.b16 %v642, %v641
      %v648 = vsel %vm261, %v643, 0
      %v651 = vsel %vm261, %v644, 0
      %v654 = vsel %vm261, %v645, 0
      %v657 = vsel %vm261, %v646, 0
      %v660 = vsel %vm274, %v634, 0
      %662 = vmatprep.subr.bf16.mxu0 0
      %663 = vmatpush1.bf16.msra.mxu0 %v660
      %664 = vmatprep.subr.bf16.mxu0 0
      %665 = vmatpush1.bf16.msra.mxu0 0
      %666 = vmatprep.subr.bf16.mxu0 0
      %667 = vmatpush1.bf16.msra.mxu0 0
      %668 = vmatprep.subr.bf16.mxu0 0
      %669 = vmatpush1.bf16.msra.mxu0 0
      %670 = vmatprep.subr.bf16.mxu0 0
      %671 = vmatpush1.bf16.msra.mxu0 0
      %672 = vmatprep.subr.bf16.mxu0 0
      %673 = vmatpush1.bf16.msra.mxu0 0
      %674 = vmatprep.subr.bf16.mxu0 0
      %675 = vmatpush1.bf16.msra.mxu0 0
      %676 = vmatprep.subr.bf16.mxu0 0
      %677 = vmatpush1.bf16.msra.mxu0 0
      %678 = vmatprep.subr.bf16.mxu0 0
      %679 = vmatpush1.bf16.msra.mxu0 0
      %680 = vmatprep.subr.bf16.mxu0 0
      %681 = vmatpush1.bf16.msra.mxu0 0
      %682 = vmatprep.subr.bf16.mxu0 0
      %683 = vmatpush1.bf16.msra.mxu0 0
      %684 = vmatprep.subr.bf16.mxu0 0
      %685 = vmatpush1.bf16.msra.mxu0 0
      %686 = vmatprep.subr.bf16.mxu0 0
      %687 = vmatpush1.bf16.msra.mxu0 0
      %688 = vmatprep.subr.bf16.mxu0 0
      %689 = vmatpush1.bf16.msra.mxu0 0
      %690 = vmatprep.subr.bf16.mxu0 0
      %691 = vmatpush1.bf16.msra.mxu0 0
      %692 = vmatprep.subr.bf16.mxu0 0
      %693 = vmatpush1.bf16.msra.mxu0 0
      %694 = vmatprep.mubr.bf16.mxu0 0
      %695 = vmatmul.mubr.bf16.gmra.mrb[0].mxu0 %v648
      %v696 = vpop.f32.mrb[0].mxu0
      %v697 = vadd.f32 0.0, %v696
      %v698 = vpop.f32.mrb[0].mxu0
      %v699 = vpop.f32.mrb[0].mxu0
      %v700 = vadd.f32 0.0, %v699
      %v701 = vpop.f32.mrb[0].mxu0
      %702 = vmatprep.mubr.bf16.mxu0 0
      %703 = vmatmul.mubr.bf16.gmra.mrb[0].mxu0 %v651
      %v704 = vpop.f32.mrb[0].mxu0
      %v705 = vadd.f32 0.0, %v704
      %v706 = vpop.f32.mrb[0].mxu0
      %v707 = vpop.f32.mrb[0].mxu0
      %v708 = vadd.f32 0.0, %v707
      %v709 = vpop.f32.mrb[0].mxu0
      %710 = vmatprep.mubr.bf16.mxu0 0
      %711 = vmatmul.mubr.bf16.gmra.mrb[0].mxu0 %v654
      %v712 = vpop.f32.mrb[0].mxu0
      %v713 = vadd.f32 0.0, %v712
      %v714 = vpop.f32.mrb[0].mxu0
      %v715 = vpop.f32.mrb[0].mxu0
      %v716 = vadd.f32 0.0, %v715
      %v717 = vpop.f32.mrb[0].mxu0
      %718 = vmatprep.mubr.bf16.mxu0 0
      %719 = vmatmul.mubr.bf16.gmra.mrb[0].mxu0 %v657
      %v720 = vpop.f32.mrb[0].mxu0
      %v721 = vadd.f32 0.0, %v720
      %v722 = vpop.f32.mrb[0].mxu0
      %v723 = vpop.f32.mrb[0].mxu0
      %v724 = vadd.f32 0.0, %v723
      %v725 = vpop.f32.mrb[0].mxu0
      %726 = vdwg.mxu0
      %v727 = vadd.f32 %v625, %v697
      %v728 = vadd.f32 %v626, %v700
      %v729 = vadd.f32 %v627, %v705
      %v730 = vadd.f32 %v628, %v708
      %v731 = vadd.f32 %v629, %v713
      %v732 = vadd.f32 %v630, %v716
      %v733 = vadd.f32 %v631, %v721
      %v734 = vadd.f32 %v632, %v724
      %735 = vst [vmem:[#allocation2] sm:$0xff] %v727
      %736 = vst [vmem:[#allocation2 + $0x8] sm:$0xff] %v728
      %737 = vst [vmem:[#allocation2 + $0x10] sm:$0xff] %v729
      %738 = vst [vmem:[#allocation2 + $0x18] sm:$0xff] %v730
      %739 = vst [vmem:[#allocation2 + $0x20] sm:$0xff] %v731
      %740 = vst [vmem:[#allocation2 + $0x28] sm:$0xff] %v732
      %741 = vst [vmem:[#allocation2 + $0x30] sm:$0xff] %v733
      %742 = vst [vmem:[#allocation2 + $0x38] sm:$0xff] %v734
      %s743 = scalar_lea.vmem %s203, 144
      %v744 = vld [vmem:[%s743] sm:$0xf]
      %v745 = vld [vmem:[%s743 + $0x8] sm:$0xf]
      %v746 = vld [vmem:[%s743 + $0x10] sm:$0xf]
      %v747 = vld [vmem:[%s743 + $0x18] sm:$0xf]
      %v748 = vld [vmem:[%s743 + $0x20] sm:$0xf]
      %v749 = vld [vmem:[%s743 + $0x28] sm:$0xf]
      %v750 = vld [vmem:[%s743 + $0x30] sm:$0xf]
      %v751 = vld [vmem:[%s743 + $0x38] sm:$0xf]
      %v752 = vld [vmem:[#allocation2] sm:$0xff]
      %v753 = vld [vmem:[#allocation2 + $0x8] sm:$0xff]
      %v754 = vld [vmem:[#allocation2 + $0x10] sm:$0xff]
      %v755 = vld [vmem:[#allocation2 + $0x18] sm:$0xff]
      %v756 = vld [vmem:[#allocation2 + $0x20] sm:$0xff]
      %v757 = vld [vmem:[#allocation2 + $0x28] sm:$0xff]
      %v758 = vld [vmem:[#allocation2 + $0x30] sm:$0xff]
      %v759 = vld [vmem:[#allocation2 + $0x38] sm:$0xff]
      %s760 = scalar_lea.vmem %s1, 12
      %v761 = vld [vmem:[%s760] sm:$0xf]
      %v770 = vunpack.c.l.b16 %v744
      %v771 = vunpack.c.l.b16 %v745
      %v772 = vunpack.c.l.b16 %v746
      %v773 = vunpack.c.l.b16 %v747
      %v774 = vunpack.c.l.b16 %v748
      %v775 = vunpack.c.l.b16 %v749
      %v776 = vunpack.c.l.b16 %v750
      %v777 = vunpack.c.l.b16 %v751
      %v778 = vpack.c.b16 %v771, %v770
      %v779 = vpack.c.b16 %v773, %v772
      %v780 = vpack.c.b16 %v775, %v774
      %v781 = vpack.c.b16 %v777, %v776
      %v783 = vsel %vm261, %v778, 0
      %v786 = vsel %vm261, %v779, 0
      %v789 = vsel %vm261, %v780, 0
      %v792 = vsel %vm261, %v781, 0
      %v795 = vsel %vm274, %v761, 0
      %797 = vmatprep.subr.bf16.mxu0 0
      %798 = vmatpush1.bf16.msra.mxu0 %v795
      %799 = vmatprep.subr.bf16.mxu0 0
      %800 = vmatpush1.bf16.msra.mxu0 0
      %801 = vmatprep.subr.bf16.mxu0 0
      %802 = vmatpush1.bf16.msra.mxu0 0
      %803 = vmatprep.subr.bf16.mxu0 0
      %804 = vmatpush1.bf16.msra.mxu0 0
      %805 = vmatprep.subr.bf16.mxu0 0
      %806 = vmatpush1.bf16.msra.mxu0 0
      %807 = vmatprep.subr.bf16.mxu0 0
      %808 = vmatpush1.bf16.msra.mxu0 0
      %809 = vmatprep.subr.bf16.mxu0 0
      %810 = vmatpush1.bf16.msra.mxu0 0
      %811 = vmatprep.subr.bf16.mxu0 0
      %812 = vmatpush1.bf16.msra.mxu0 0
      %813 = vmatprep.subr.bf16.mxu0 0
      %814 = vmatpush1.bf16.msra.mxu0 0
      %815 = vmatprep.subr.bf16.mxu0 0
      %816 = vmatpush1.bf16.msra.mxu0 0
      %817 = vmatprep.subr.bf16.mxu0 0
      %818 = vmatpush1.bf16.msra.mxu0 0
      %819 = vmatprep.subr.bf16.mxu0 0
      %820 = vmatpush1.bf16.msra.mxu0 0
      %821 = vmatprep.subr.bf16.mxu0 0
      %822 = vmatpush1.bf16.msra.mxu0 0
      %823 = vmatprep.subr.bf16.mxu0 0
      %824 = vmatpush1.bf16.msra.mxu0 0
      %825 = vmatprep.subr.bf16.mxu0 0
      %826 = vmatpush1.bf16.msra.mxu0 0
      %827 = vmatprep.subr.bf16.mxu0 0
      %828 = vmatpush1.bf16.msra.mxu0 0
      %829 = vmatprep.mubr.bf16.mxu0 0
      %830 = vmatmul.mubr.bf16.gmra.mrb[0].mxu0 %v783
      %v831 = vpop.f32.mrb[0].mxu0
      %v832 = vadd.f32 0.0, %v831
      %v833 = vpop.f32.mrb[0].mxu0
      %v834 = vpop.f32.mrb[0].mxu0
      %v835 = vadd.f32 0.0, %v834
      %v836 = vpop.f32.mrb[0].mxu0
      %837 = vmatprep.mubr.bf16.mxu0 0
      %838 = vmatmul.mubr.bf16.gmra.mrb[0].mxu0 %v786
      %v839 = vpop.f32.mrb[0].mxu0
      %v840 = vadd.f32 0.0, %v839
      %v841 = vpop.f32.mrb[0].mxu0
      %v842 = vpop.f32.mrb[0].mxu0
      %v843 = vadd.f32 0.0, %v842
      %v844 = vpop.f32.mrb[0].mxu0
      %845 = vmatprep.mubr.bf16.mxu0 0
      %846 = vmatmul.mubr.bf16.gmra.mrb[0].mxu0 %v789
      %v847 = vpop.f32.mrb[0].mxu0
      %v848 = vadd.f32 0.0, %v847
      %v849 = vpop.f32.mrb[0].mxu0
      %v850 = vpop.f32.mrb[0].mxu0
      %v851 = vadd.f32 0.0, %v850
      %v852 = vpop.f32.mrb[0].mxu0
      %853 = vmatprep.mubr.bf16.mxu0 0
      %854 = vmatmul.mubr.bf16.gmra.mrb[0].mxu0 %v792
      %v855 = vpop.f32.mrb[0].mxu0
      %v856 = vadd.f32 0.0, %v855
      %v857 = vpop.f32.mrb[0].mxu0
      %v858 = vpop.f32.mrb[0].mxu0
      %v859 = vadd.f32 0.0, %v858
      %v860 = vpop.f32.mrb[0].mxu0
      %861 = vdwg.mxu0
      %v862 = vadd.f32 %v752, %v832
      %v863 = vadd.f32 %v753, %v835
      %v864 = vadd.f32 %v754, %v840
      %v865 = vadd.f32 %v755, %v843
      %v866 = vadd.f32 %v756, %v848
      %v867 = vadd.f32 %v757, %v851
      %v868 = vadd.f32 %v758, %v856
      %v869 = vadd.f32 %v759, %v859
      %870 = vst [vmem:[#allocation2] sm:$0xff] %v862
      %871 = vst [vmem:[#allocation2 + $0x8] sm:$0xff] %v863
      %872 = vst [vmem:[#allocation2 + $0x10] sm:$0xff] %v864
      %873 = vst [vmem:[#allocation2 + $0x18] sm:$0xff] %v865
      %874 = vst [vmem:[#allocation2 + $0x20] sm:$0xff] %v866
      %875 = vst [vmem:[#allocation2 + $0x28] sm:$0xff] %v867
      %876 = vst [vmem:[#allocation2 + $0x30] sm:$0xff] %v868
      %877 = vst [vmem:[#allocation2 + $0x38] sm:$0xff] %v869
      %s878 = scalar_lea.vmem %s203, 216
      %v879 = vld [vmem:[%s878] sm:$0xf]
      %v880 = vld [vmem:[%s878 + $0x8] sm:$0xf]
      %v881 = vld [vmem:[%s878 + $0x10] sm:$0xf]
      %v882 = vld [vmem:[%s878 + $0x18] sm:$0xf]
      %v883 = vld [vmem:[%s878 + $0x20] sm:$0xf]
      %v884 = vld [vmem:[%s878 + $0x28] sm:$0xf]
      %v885 = vld [vmem:[%s878 + $0x30] sm:$0xf]
      %v886 = vld [vmem:[%s878 + $0x38] sm:$0xf]
      %v887 = vld [vmem:[#allocation2] sm:$0xff]
      %v888 = vld [vmem:[#allocation2 + $0x8] sm:$0xff]
      %v889 = vld [vmem:[#allocation2 + $0x10] sm:$0xff]
      %v890 = vld [vmem:[#allocation2 + $0x18] sm:$0xff]
      %v891 = vld [vmem:[#allocation2 + $0x20] sm:$0xff]
      %v892 = vld [vmem:[#allocation2 + $0x28] sm:$0xff]
      %v893 = vld [vmem:[#allocation2 + $0x30] sm:$0xff]
      %v894 = vld [vmem:[#allocation2 + $0x38] sm:$0xff]
      %s895 = scalar_lea.vmem %s1, 16
      %v896 = vld [vmem:[%s895] sm:$0xf]
      %v905 = vunpack.c.l.b16 %v879
      %v906 = vunpack.c.l.b16 %v880
      %v907 = vunpack.c.l.b16 %v881
      %v908 = vunpack.c.l.b16 %v882
      %v909 = vunpack.c.l.b16 %v883
      %v910 = vunpack.c.l.b16 %v884
      %v911 = vunpack.c.l.b16 %v885
      %v912 = vunpack.c.l.b16 %v886
      %v913 = vpack.c.b16 %v906, %v905
      %v914 = vpack.c.b16 %v908, %v907
      %v915 = vpack.c.b16 %v910, %v909
      %v916 = vpack.c.b16 %v912, %v911
      %v918 = vsel %vm261, %v913, 0
      %v921 = vsel %vm261, %v914, 0
      %v924 = vsel %vm261, %v915, 0
      %v927 = vsel %vm261, %v916, 0
      %v930 = vsel %vm274, %v896, 0
      %932 = vmatprep.subr.bf16.mxu0 0
      %933 = vmatpush1.bf16.msra.mxu0 %v930
      %934 = vmatprep.subr.bf16.mxu0 0
      %935 = vmatpush1.bf16.msra.mxu0 0
      %936 = vmatprep.subr.bf16.mxu0 0
      %937 = vmatpush1.bf16.msra.mxu0 0
      %938 = vmatprep.subr.bf16.mxu0 0
      %939 = vmatpush1.bf16.msra.mxu0 0
      %940 = vmatprep.subr.bf16.mxu0 0
      %941 = vmatpush1.bf16.msra.mxu0 0
      %942 = vmatprep.subr.bf16.mxu0 0
      %943 = vmatpush1.bf16.msra.mxu0 0
      %944 = vmatprep.subr.bf16.mxu0 0
      %945 = vmatpush1.bf16.msra.mxu0 0
      %946 = vmatprep.subr.bf16.mxu0 0
      %947 = vmatpush1.bf16.msra.mxu0 0
      %948 = vmatprep.subr.bf16.mxu0 0
      %949 = vmatpush1.bf16.msra.mxu0 0
      %950 = vmatprep.subr.bf16.mxu0 0
      %951 = vmatpush1.bf16.msra.mxu0 0
      %952 = vmatprep.subr.bf16.mxu0 0
      %953 = vmatpush1.bf16.msra.mxu0 0
      %954 = vmatprep.subr.bf16.mxu0 0
      %955 = vmatpush1.bf16.msra.mxu0 0
      %956 = vmatprep.subr.bf16.mxu0 0
      %957 = vmatpush1.bf16.msra.mxu0 0
      %958 = vmatprep.subr.bf16.mxu0 0
      %959 = vmatpush1.bf16.msra.mxu0 0
      %960 = vmatprep.subr.bf16.mxu0 0
      %961 = vmatpush1.bf16.msra.mxu0 0
      %962 = vmatprep.subr.bf16.mxu0 0
      %963 = vmatpush1.bf16.msra.mxu0 0
      %964 = vmatprep.mubr.bf16.mxu0 0
      %965 = vmatmul.mubr.bf16.gmra.mrb[0].mxu0 %v918
      %v966 = vpop.f32.mrb[0].mxu0
      %v967 = vadd.f32 0.0, %v966
      %v968 = vpop.f32.mrb[0].mxu0
      %v969 = vpop.f32.mrb[0].mxu0
      %v970 = vadd.f32 0.0, %v969
      %v971 = vpop.f32.mrb[0].mxu0
      %972 = vmatprep.mubr.bf16.mxu0 0
      %973 = vmatmul.mubr.bf16.gmra.mrb[0].mxu0 %v921
      %v974 = vpop.f32.mrb[0].mxu0
      %v975 = vadd.f32 0.0, %v974
      %v976 = vpop.f32.mrb[0].mxu0
      %v977 = vpop.f32.mrb[0].mxu0
      %v978 = vadd.f32 0.0, %v977
      %v979 = vpop.f32.mrb[0].mxu0
      %980 = vmatprep.mubr.bf16.mxu0 0
      %981 = vmatmul.mubr.bf16.gmra.mrb[0].mxu0 %v924
      %v982 = vpop.f32.mrb[0].mxu0
      %v983 = vadd.f32 0.0, %v982
      %v984 = vpop.f32.mrb[0].mxu0
      %v985 = vpop.f32.mrb[0].mxu0
      %v986 = vadd.f32 0.0, %v985
      %v987 = vpop.f32.mrb[0].mxu0
      %988 = vmatprep.mubr.bf16.mxu0 0
      %989 = vmatmul.mubr.bf16.gmra.mrb[0].mxu0 %v927
      %v990 = vpop.f32.mrb[0].mxu0
      %v991 = vadd.f32 0.0, %v990
      %v992 = vpop.f32.mrb[0].mxu0
      %v993 = vpop.f32.mrb[0].mxu0
      %v994 = vadd.f32 0.0, %v993
      %v995 = vpop.f32.mrb[0].mxu0
      %996 = vdwg.mxu0
      %v997 = vadd.f32 %v887, %v967
      %v998 = vadd.f32 %v888, %v970
      %v999 = vadd.f32 %v889, %v975
      %v1000 = vadd.f32 %v890, %v978
      %v1001 = vadd.f32 %v891, %v983
      %v1002 = vadd.f32 %v892, %v986
      %v1003 = vadd.f32 %v893, %v991
      %v1004 = vadd.f32 %v894, %v994
      %1005 = vst [vmem:[#allocation2] sm:$0xff] %v997
      %1006 = vst [vmem:[#allocation2 + $0x8] sm:$0xff] %v998
      %1007 = vst [vmem:[#allocation2 + $0x10] sm:$0xff] %v999
      %1008 = vst [vmem:[#allocation2 + $0x18] sm:$0xff] %v1000
      %1009 = vst [vmem:[#allocation2 + $0x20] sm:$0xff] %v1001
      %1010 = vst [vmem:[#allocation2 + $0x28] sm:$0xff] %v1002
      %1011 = vst [vmem:[#allocation2 + $0x30] sm:$0xff] %v1003
      %1012 = vst [vmem:[#allocation2 + $0x38] sm:$0xff] %v1004
      %v1013 = vld [vmem:[%s743] sm:$0xf]
      %v1014 = vld [vmem:[%s743 + $0x4] sm:$0x1]
      %v1015 = vld [vmem:[%s743 + $0x8] sm:$0xf]
      %v1016 = vld [vmem:[%s743 + $0xc] sm:$0x1]
      %v1017 = vld [vmem:[%s743 + $0x10] sm:$0xf]
      %v1018 = vld [vmem:[%s743 + $0x14] sm:$0x1]
      %v1019 = vld [vmem:[%s743 + $0x18] sm:$0xf]
      %v1020 = vld [vmem:[%s743 + $0x1c] sm:$0x1]
      %v1021 = vld [vmem:[%s743 + $0x20] sm:$0xf]
      %v1022 = vld [vmem:[%s743 + $0x24] sm:$0x1]
      %v1023 = vld [vmem:[%s743 + $0x28] sm:$0xf]
      %v1024 = vld [vmem:[%s743 + $0x2c] sm:$0x1]
      %v1025 = vld [vmem:[%s743 + $0x30] sm:$0xf]
      %v1026 = vld [vmem:[%s743 + $0x34] sm:$0x1]
      %v1027 = vld [vmem:[%s743 + $0x38] sm:$0xf]
      %v1028 = vld [vmem:[%s743 + $0x3c] sm:$0x1]
      %v1030 = vshrl.u32 %v1013, 16
      %v1032 = vrot.slane %v1030, 4
      %v1033 = vshll.u32 %v1013, 16
      %v1035 = vrot.slane %v1033, 5
      %v1036 = vor.u32 %v1032, %v1035
      %v1037 = vrot.slane %v1036, 4
      %v1039 = vshll.u32 %v1014, 16
      %v1041 = vrot.slane %v1039, 5
      %v1042 = vsel %vm512, %v1037, %v1041
      %v1044 = vshrl.u32 %v1015, 16
      %v1046 = vrot.slane %v1044, 4
      %v1047 = vshll.u32 %v1015, 16
      %v1049 = vrot.slane %v1047, 5
      %v1050 = vor.u32 %v1046, %v1049
      %v1051 = vrot.slane %v1050, 4
      %v1053 = vshll.u32 %v1016, 16
      %v1055 = vrot.slane %v1053, 5
      %v1056 = vsel %vm512, %v1051, %v1055
      %v1058 = vshrl.u32 %v1017, 16
      %v1060 = vrot.slane %v1058, 4
      %v1061 = vshll.u32 %v1017, 16
      %v1063 = vrot.slane %v1061, 5
      %v1064 = vor.u32 %v1060, %v1063
      %v1065 = vrot.slane %v1064, 4
      %v1067 = vshll.u32 %v1018, 16
      %v1069 = vrot.slane %v1067, 5
      %v1070 = vsel %vm512, %v1065, %v1069
      %v1072 = vshrl.u32 %v1019, 16
      %v1074 = vrot.slane %v1072, 4
      %v1075 = vshll.u32 %v1019, 16
      %v1077 = vrot.slane %v1075, 5
      %v1078 = vor.u32 %v1074, %v1077
      %v1079 = vrot.slane %v1078, 4
      %v1081 = vshll.u32 %v1020, 16
      %v1083 = vrot.slane %v1081, 5
      %v1084 = vsel %vm512, %v1079, %v1083
      %v1086 = vshrl.u32 %v1021, 16
      %v1088 = vrot.slane %v1086, 4
      %v1089 = vshll.u32 %v1021, 16
      %v1091 = vrot.slane %v1089, 5
      %v1092 = vor.u32 %v1088, %v1091
      %v1093 = vrot.slane %v1092, 4
      %v1095 = vshll.u32 %v1022, 16
      %v1097 = vrot.slane %v1095, 5
      %v1098 = vsel %vm512, %v1093, %v1097
      %v1100 = vshrl.u32 %v1023, 16
      %v1102 = vrot.slane %v1100, 4
      %v1103 = vshll.u32 %v1023, 16
      %v1105 = vrot.slane %v1103, 5
      %v1106 = vor.u32 %v1102, %v1105
      %v1107 = vrot.slane %v1106, 4
      %v1109 = vshll.u32 %v1024, 16
      %v1111 = vrot.slane %v1109, 5
      %v1112 = vsel %vm512, %v1107, %v1111
      %v1114 = vshrl.u32 %v1025, 16
      %v1116 = vrot.slane %v1114, 4
      %v1117 = vshll.u32 %v1025, 16
      %v1119 = vrot.slane %v1117, 5
      %v1120 = vor.u32 %v1116, %v1119
      %v1121 = vrot.slane %v1120, 4
      %v1123 = vshll.u32 %v1026, 16
      %v1125 = vrot.slane %v1123, 5
      %v1126 = vsel %vm512, %v1121, %v1125
      %v1128 = vshrl.u32 %v1027, 16
      %v1130 = vrot.slane %v1128, 4
      %v1131 = vshll.u32 %v1027, 16
      %v1133 = vrot.slane %v1131, 5
      %v1134 = vor.u32 %v1130, %v1133
      %v1135 = vrot.slane %v1134, 4
      %v1137 = vshll.u32 %v1028, 16
      %v1139 = vrot.slane %v1137, 5
      %v1140 = vsel %vm512, %v1135, %v1139
      %v1141 = vld [vmem:[#allocation2] sm:$0xff]
      %v1142 = vld [vmem:[#allocation2 + $0x8] sm:$0xff]
      %v1143 = vld [vmem:[#allocation2 + $0x10] sm:$0xff]
      %v1144 = vld [vmem:[#allocation2 + $0x18] sm:$0xff]
      %v1145 = vld [vmem:[#allocation2 + $0x20] sm:$0xff]
      %v1146 = vld [vmem:[#allocation2 + $0x28] sm:$0xff]
      %v1147 = vld [vmem:[#allocation2 + $0x30] sm:$0xff]
      %v1148 = vld [vmem:[#allocation2 + $0x38] sm:$0xff]
      %s1149 = scalar_lea.vmem %s1, 20
      %v1150 = vld [vmem:[%s1149] sm:$0xf]
      %v1151 = vunpack.c.l.b16 %v1042
      %v1152 = vunpack.c.l.b16 %v1056
      %v1153 = vunpack.c.l.b16 %v1070
      %v1154 = vunpack.c.l.b16 %v1084
      %v1155 = vunpack.c.l.b16 %v1098
      %v1156 = vunpack.c.l.b16 %v1112
      %v1157 = vunpack.c.l.b16 %v1126
      %v1158 = vunpack.c.l.b16 %v1140
      %v1159 = vpack.c.b16 %v1152, %v1151
      %v1160 = vpack.c.b16 %v1154, %v1153
      %v1161 = vpack.c.b16 %v1156, %v1155
      %v1162 = vpack.c.b16 %v1158, %v1157
      %v1164 = vsel %vm261, %v1159, 0
      %v1167 = vsel %vm261, %v1160, 0
      %v1170 = vsel %vm261, %v1161, 0
      %v1173 = vsel %vm261, %v1162, 0
      %v1176 = vsel %vm274, %v1150, 0
      %1178 = vmatprep.subr.bf16.mxu0 0
      %1179 = vmatpush1.bf16.msra.mxu0 %v1176
      %1180 = vmatprep.subr.bf16.mxu0 0
      %1181 = vmatpush1.bf16.msra.mxu0 0
      %1182 = vmatprep.subr.bf16.mxu0 0
      %1183 = vmatpush1.bf16.msra.mxu0 0
      %1184 = vmatprep.subr.bf16.mxu0 0
      %1185 = vmatpush1.bf16.msra.mxu0 0
      %1186 = vmatprep.subr.bf16.mxu0 0
      %1187 = vmatpush1.bf16.msra.mxu0 0
      %1188 = vmatprep.subr.bf16.mxu0 0
      %1189 = vmatpush1.bf16.msra.mxu0 0
      %1190 = vmatprep.subr.bf16.mxu0 0
      %1191 = vmatpush1.bf16.msra.mxu0 0
      %1192 = vmatprep.subr.bf16.mxu0 0
      %1193 = vmatpush1.bf16.msra.mxu0 0
      %1194 = vmatprep.subr.bf16.mxu0 0
      %1195 = vmatpush1.bf16.msra.mxu0 0
      %1196 = vmatprep.subr.bf16.mxu0 0
      %1197 = vmatpush1.bf16.msra.mxu0 0
      %1198 = vmatprep.subr.bf16.mxu0 0
      %1199 = vmatpush1.bf16.msra.mxu0 0
      %1200 = vmatprep.subr.bf16.mxu0 0
      %1201 = vmatpush1.bf16.msra.mxu0 0
      %1202 = vmatprep.subr.bf16.mxu0 0
      %1203 = vmatpush1.bf16.msra.mxu0 0
      %1204 = vmatprep.subr.bf16.mxu0 0
      %1205 = vmatpush1.bf16.msra.mxu0 0
      %1206 = vmatprep.subr.bf16.mxu0 0
      %1207 = vmatpush1.bf16.msra.mxu0 0
      %1208 = vmatprep.subr.bf16.mxu0 0
      %1209 = vmatpush1.bf16.msra.mxu0 0
      %1210 = vmatprep.mubr.bf16.mxu0 0
      %1211 = vmatmul.mubr.bf16.gmra.mrb[0].mxu0 %v1164
      %v1212 = vpop.f32.mrb[0].mxu0
      %v1213 = vadd.f32 0.0, %v1212
      %v1214 = vpop.f32.mrb[0].mxu0
      %v1215 = vpop.f32.mrb[0].mxu0
      %v1216 = vadd.f32 0.0, %v1215
      %v1217 = vpop.f32.mrb[0].mxu0
      %1218 = vmatprep.mubr.bf16.mxu0 0
      %1219 = vmatmul.mubr.bf16.gmra.mrb[0].mxu0 %v1167
      %v1220 = vpop.f32.mrb[0].mxu0
      %v1221 = vadd.f32 0.0, %v1220
      %v1222 = vpop.f32.mrb[0].mxu0
      %v1223 = vpop.f32.mrb[0].mxu0
      %v1224 = vadd.f32 0.0, %v1223
      %v1225 = vpop.f32.mrb[0].mxu0
      %1226 = vmatprep.mubr.bf16.mxu0 0
      %1227 = vmatmul.mubr.bf16.gmra.mrb[0].mxu0 %v1170
      %v1228 = vpop.f32.mrb[0].mxu0
      %v1229 = vadd.f32 0.0, %v1228
      %v1230 = vpop.f32.mrb[0].mxu0
      %v1231 = vpop.f32.mrb[0].mxu0
      %v1232 = vadd.f32 0.0, %v1231
      %v1233 = vpop.f32.mrb[0].mxu0
      %1234 = vmatprep.mubr.bf16.mxu0 0
      %1235 = vmatmul.mubr.bf16.gmra.mrb[0].mxu0 %v1173
      %v1236 = vpop.f32.mrb[0].mxu0
      %v1237 = vadd.f32 0.0, %v1236
      %v1238 = vpop.f32.mrb[0].mxu0
      %v1239 = vpop.f32.mrb[0].mxu0
      %v1240 = vadd.f32 0.0, %v1239
      %v1241 = vpop.f32.mrb[0].mxu0
      %1242 = vdwg.mxu0
      %v1243 = vadd.f32 %v1141, %v1213
      %v1244 = vadd.f32 %v1142, %v1216
      %v1245 = vadd.f32 %v1143, %v1221
      %v1246 = vadd.f32 %v1144, %v1224
      %v1247 = vadd.f32 %v1145, %v1229
      %v1248 = vadd.f32 %v1146, %v1232
      %v1249 = vadd.f32 %v1147, %v1237
      %v1250 = vadd.f32 %v1148, %v1240
      %1251 = vst [vmem:[#allocation2] sm:$0xff] %v1243
      %1252 = vst [vmem:[#allocation2 + $0x8] sm:$0xff] %v1244
      %1253 = vst [vmem:[#allocation2 + $0x10] sm:$0xff] %v1245
      %1254 = vst [vmem:[#allocation2 + $0x18] sm:$0xff] %v1246
      %1255 = vst [vmem:[#allocation2 + $0x20] sm:$0xff] %v1247
      %1256 = vst [vmem:[#allocation2 + $0x28] sm:$0xff] %v1248
      %1257 = vst [vmem:[#allocation2 + $0x30] sm:$0xff] %v1249
      %1258 = vst [vmem:[#allocation2 + $0x38] sm:$0xff] %v1250
      %s1259 = scalar_lea.vmem %s203, 8
      %v1260 = vld [vmem:[%s1259] sm:$0xf]
      %v1261 = vld [vmem:[%s1259 + $0x8] sm:$0xf]
      %v1262 = vld [vmem:[%s1259 + $0x10] sm:$0xf]
      %v1263 = vld [vmem:[%s1259 + $0x18] sm:$0xf]
      %v1264 = vld [vmem:[%s1259 + $0x20] sm:$0xf]
      %v1265 = vld [vmem:[%s1259 + $0x28] sm:$0xf]
      %v1266 = vld [vmem:[%s1259 + $0x30] sm:$0xf]
      %v1267 = vld [vmem:[%s1259 + $0x38] sm:$0xf]
      %v1268 = vld [vmem:[#allocation2] sm:$0xff]
      %v1269 = vld [vmem:[#allocation2 + $0x8] sm:$0xff]
      %v1270 = vld [vmem:[#allocation2 + $0x10] sm:$0xff]
      %v1271 = vld [vmem:[#allocation2 + $0x18] sm:$0xff]
      %v1272 = vld [vmem:[#allocation2 + $0x20] sm:$0xff]
      %v1273 = vld [vmem:[#allocation2 + $0x28] sm:$0xff]
      %v1274 = vld [vmem:[#allocation2 + $0x30] sm:$0xff]
      %v1275 = vld [vmem:[#allocation2 + $0x38] sm:$0xff]
      %s1276 = scalar_lea.vmem %s1, 24
      %v1277 = vld [vmem:[%s1276] sm:$0xf]
      %v1286 = vunpack.c.l.b16 %v1260
      %v1287 = vunpack.c.l.b16 %v1261
      %v1288 = vunpack.c.l.b16 %v1262
      %v1289 = vunpack.c.l.b16 %v1263
      %v1290 = vunpack.c.l.b16 %v1264
      %v1291 = vunpack.c.l.b16 %v1265
      %v1292 = vunpack.c.l.b16 %v1266
      %v1293 = vunpack.c.l.b16 %v1267
      %v1294 = vpack.c.b16 %v1287, %v1286
      %v1295 = vpack.c.b16 %v1289, %v1288
      %v1296 = vpack.c.b16 %v1291, %v1290
      %v1297 = vpack.c.b16 %v1293, %v1292
      %v1299 = vsel %vm261, %v1294, 0
      %v1302 = vsel %vm261, %v1295, 0
      %v1305 = vsel %vm261, %v1296, 0
      %v1308 = vsel %vm261, %v1297, 0
      %v1311 = vsel %vm274, %v1277, 0
      %1313 = vmatprep.subr.bf16.mxu0 0
      %1314 = vmatpush1.bf16.msra.mxu0 %v1311
      %1315 = vmatprep.subr.bf16.mxu0 0
      %1316 = vmatpush1.bf16.msra.mxu0 0
      %1317 = vmatprep.subr.bf16.mxu0 0
      %1318 = vmatpush1.bf16.msra.mxu0 0
      %1319 = vmatprep.subr.bf16.mxu0 0
      %1320 = vmatpush1.bf16.msra.mxu0 0
      %1321 = vmatprep.subr.bf16.mxu0 0
      %1322 = vmatpush1.bf16.msra.mxu0 0
      %1323 = vmatprep.subr.bf16.mxu0 0
      %1324 = vmatpush1.bf16.msra.mxu0 0
      %1325 = vmatprep.subr.bf16.mxu0 0
      %1326 = vmatpush1.bf16.msra.mxu0 0
      %1327 = vmatprep.subr.bf16.mxu0 0
      %1328 = vmatpush1.bf16.msra.mxu0 0
      %1329 = vmatprep.subr.bf16.mxu0 0
      %1330 = vmatpush1.bf16.msra.mxu0 0
      %1331 = vmatprep.subr.bf16.mxu0 0
      %1332 = vmatpush1.bf16.msra.mxu0 0
      %1333 = vmatprep.subr.bf16.mxu0 0
      %1334 = vmatpush1.bf16.msra.mxu0 0
      %1335 = vmatprep.subr.bf16.mxu0 0
      %1336 = vmatpush1.bf16.msra.mxu0 0
      %1337 = vmatprep.subr.bf16.mxu0 0
      %1338 = vmatpush1.bf16.msra.mxu0 0
      %1339 = vmatprep.subr.bf16.mxu0 0
      %1340 = vmatpush1.bf16.msra.mxu0 0
      %1341 = vmatprep.subr.bf16.mxu0 0
      %1342 = vmatpush1.bf16.msra.mxu0 0
      %1343 = vmatprep.subr.bf16.mxu0 0
      %1344 = vmatpush1.bf16.msra.mxu0 0
      %1345 = vmatprep.mubr.bf16.mxu0 0
      %1346 = vmatmul.mubr.bf16.gmra.mrb[0].mxu0 %v1299
      %v1347 = vpop.f32.mrb[0].mxu0
      %v1348 = vadd.f32 0.0, %v1347
      %v1349 = vpop.f32.mrb[0].mxu0
      %v1350 = vpop.f32.mrb[0].mxu0
      %v1351 = vadd.f32 0.0, %v1350
      %v1352 = vpop.f32.mrb[0].mxu0
      %1353 = vmatprep.mubr.bf16.mxu0 0
      %1354 = vmatmul.mubr.bf16.gmra.mrb[0].mxu0 %v1302
      %v1355 = vpop.f32.mrb[0].mxu0
      %v1356 = vadd.f32 0.0, %v1355
      %v1357 = vpop.f32.mrb[0].mxu0
      %v1358 = vpop.f32.mrb[0].mxu0
      %v1359 = vadd.f32 0.0, %v1358
      %v1360 = vpop.f32.mrb[0].mxu0
      %1361 = vmatprep.mubr.bf16.mxu0 0
      %1362 = vmatmul.mubr.bf16.gmra.mrb[0].mxu0 %v1305
      %v1363 = vpop.f32.mrb[0].mxu0
      %v1364 = vadd.f32 0.0, %v1363
      %v1365 = vpop.f32.mrb[0].mxu0
      %v1366 = vpop.f32.mrb[0].mxu0
      %v1367 = vadd.f32 0.0, %v1366
      %v1368 = vpop.f32.mrb[0].mxu0
      %1369 = vmatprep.mubr.bf16.mxu0 0
      %1370 = vmatmul.mubr.bf16.gmra.mrb[0].mxu0 %v1308
      %v1371 = vpop.f32.mrb[0].mxu0
      %v1372 = vadd.f32 0.0, %v1371
      %v1373 = vpop.f32.mrb[0].mxu0
      %v1374 = vpop.f32.mrb[0].mxu0
      %v1375 = vadd.f32 0.0, %v1374
      %v1376 = vpop.f32.mrb[0].mxu0
      %1377 = vdwg.mxu0
      %v1378 = vadd.f32 %v1268, %v1348
      %v1379 = vadd.f32 %v1269, %v1351
      %v1380 = vadd.f32 %v1270, %v1356
      %v1381 = vadd.f32 %v1271, %v1359
      %v1382 = vadd.f32 %v1272, %v1364
      %v1383 = vadd.f32 %v1273, %v1367
      %v1384 = vadd.f32 %v1274, %v1372
      %v1385 = vadd.f32 %v1275, %v1375
      %1386 = vst [vmem:[#allocation2] sm:$0xff] %v1378
      %1387 = vst [vmem:[#allocation2 + $0x8] sm:$0xff] %v1379
      %1388 = vst [vmem:[#allocation2 + $0x10] sm:$0xff] %v1380
      %1389 = vst [vmem:[#allocation2 + $0x18] sm:$0xff] %v1381
      %1390 = vst [vmem:[#allocation2 + $0x20] sm:$0xff] %v1382
      %1391 = vst [vmem:[#allocation2 + $0x28] sm:$0xff] %v1383
      %1392 = vst [vmem:[#allocation2 + $0x30] sm:$0xff] %v1384
      %1393 = vst [vmem:[#allocation2 + $0x38] sm:$0xff] %v1385
      %s1394 = scalar_lea.vmem %s203, 80
      %v1395 = vld [vmem:[%s1394] sm:$0xf]
      %v1396 = vld [vmem:[%s1394 + $0x8] sm:$0xf]
      %v1397 = vld [vmem:[%s1394 + $0x10] sm:$0xf]
      %v1398 = vld [vmem:[%s1394 + $0x18] sm:$0xf]
      %v1399 = vld [vmem:[%s1394 + $0x20] sm:$0xf]
      %v1400 = vld [vmem:[%s1394 + $0x28] sm:$0xf]
      %v1401 = vld [vmem:[%s1394 + $0x30] sm:$0xf]
      %v1402 = vld [vmem:[%s1394 + $0x38] sm:$0xf]
      %v1403 = vld [vmem:[#allocation2] sm:$0xff]
      %v1404 = vld [vmem:[#allocation2 + $0x8] sm:$0xff]
      %v1405 = vld [vmem:[#allocation2 + $0x10] sm:$0xff]
      %v1406 = vld [vmem:[#allocation2 + $0x18] sm:$0xff]
      %v1407 = vld [vmem:[#allocation2 + $0x20] sm:$0xff]
      %v1408 = vld [vmem:[#allocation2 + $0x28] sm:$0xff]
      %v1409 = vld [vmem:[#allocation2 + $0x30] sm:$0xff]
      %v1410 = vld [vmem:[#allocation2 + $0x38] sm:$0xff]
      %s1411 = scalar_lea.vmem %s1, 28
      %v1412 = vld [vmem:[%s1411] sm:$0xf]
      %v1421 = vunpack.c.l.b16 %v1395
      %v1422 = vunpack.c.l.b16 %v1396
      %v1423 = vunpack.c.l.b16 %v1397
      %v1424 = vunpack.c.l.b16 %v1398
      %v1425 = vunpack.c.l.b16 %v1399
      %v1426 = vunpack.c.l.b16 %v1400
      %v1427 = vunpack.c.l.b16 %v1401
      %v1428 = vunpack.c.l.b16 %v1402
      %v1429 = vpack.c.b16 %v1422, %v1421
      %v1430 = vpack.c.b16 %v1424, %v1423
      %v1431 = vpack.c.b16 %v1426, %v1425
      %v1432 = vpack.c.b16 %v1428, %v1427
      %v1434 = vsel %vm261, %v1429, 0
      %v1437 = vsel %vm261, %v1430, 0
      %v1440 = vsel %vm261, %v1431, 0
      %v1443 = vsel %vm261, %v1432, 0
      %v1446 = vsel %vm274, %v1412, 0
      %1448 = vmatprep.subr.bf16.mxu0 0
      %1449 = vmatpush1.bf16.msra.mxu0 %v1446
      %1450 = vmatprep.subr.bf16.mxu0 0
      %1451 = vmatpush1.bf16.msra.mxu0 0
      %1452 = vmatprep.subr.bf16.mxu0 0
      %1453 = vmatpush1.bf16.msra.mxu0 0
      %1454 = vmatprep.subr.bf16.mxu0 0
      %1455 = vmatpush1.bf16.msra.mxu0 0
      %1456 = vmatprep.subr.bf16.mxu0 0
      %1457 = vmatpush1.bf16.msra.mxu0 0
      %1458 = vmatprep.subr.bf16.mxu0 0
      %1459 = vmatpush1.bf16.msra.mxu0 0
      %1460 = vmatprep.subr.bf16.mxu0 0
      %1461 = vmatpush1.bf16.msra.mxu0 0
      %1462 = vmatprep.subr.bf16.mxu0 0
      %1463 = vmatpush1.bf16.msra.mxu0 0
      %1464 = vmatprep.subr.bf16.mxu0 0
      %1465 = vmatpush1.bf16.msra.mxu0 0
      %1466 = vmatprep.subr.bf16.mxu0 0
      %1467 = vmatpush1.bf16.msra.mxu0 0
      %1468 = vmatprep.subr.bf16.mxu0 0
      %1469 = vmatpush1.bf16.msra.mxu0 0
      %1470 = vmatprep.subr.bf16.mxu0 0
      %1471 = vmatpush1.bf16.msra.mxu0 0
      %1472 = vmatprep.subr.bf16.mxu0 0
      %1473 = vmatpush1.bf16.msra.mxu0 0
      %1474 = vmatprep.subr.bf16.mxu0 0
      %1475 = vmatpush1.bf16.msra.mxu0 0
      %1476 = vmatprep.subr.bf16.mxu0 0
      %1477 = vmatpush1.bf16.msra.mxu0 0
      %1478 = vmatprep.subr.bf16.mxu0 0
      %1479 = vmatpush1.bf16.msra.mxu0 0
      %1480 = vmatprep.mubr.bf16.mxu0 0
      %1481 = vmatmul.mubr.bf16.gmra.mrb[0].mxu0 %v1434
      %v1482 = vpop.f32.mrb[0].mxu0
      %v1483 = vadd.f32 0.0, %v1482
      %v1484 = vpop.f32.mrb[0].mxu0
      %v1485 = vpop.f32.mrb[0].mxu0
      %v1486 = vadd.f32 0.0, %v1485
      %v1487 = vpop.f32.mrb[0].mxu0
      %1488 = vmatprep.mubr.bf16.mxu0 0
      %1489 = vmatmul.mubr.bf16.gmra.mrb[0].mxu0 %v1437
      %v1490 = vpop.f32.mrb[0].mxu0
      %v1491 = vadd.f32 0.0, %v1490
      %v1492 = vpop.f32.mrb[0].mxu0
      %v1493 = vpop.f32.mrb[0].mxu0
      %v1494 = vadd.f32 0.0, %v1493
      %v1495 = vpop.f32.mrb[0].mxu0
      %1496 = vmatprep.mubr.bf16.mxu0 0
      %1497 = vmatmul.mubr.bf16.gmra.mrb[0].mxu0 %v1440
      %v1498 = vpop.f32.mrb[0].mxu0
      %v1499 = vadd.f32 0.0, %v1498
      %v1500 = vpop.f32.mrb[0].mxu0
      %v1501 = vpop.f32.mrb[0].mxu0
      %v1502 = vadd.f32 0.0, %v1501
      %v1503 = vpop.f32.mrb[0].mxu0
      %1504 = vmatprep.mubr.bf16.mxu0 0
      %1505 = vmatmul.mubr.bf16.gmra.mrb[0].mxu0 %v1443
      %v1506 = vpop.f32.mrb[0].mxu0
      %v1507 = vadd.f32 0.0, %v1506
      %v1508 = vpop.f32.mrb[0].mxu0
      %v1509 = vpop.f32.mrb[0].mxu0
      %v1510 = vadd.f32 0.0, %v1509
      %v1511 = vpop.f32.mrb[0].mxu0
      %1512 = vdwg.mxu0
      %v1513 = vadd.f32 %v1403, %v1483
      %v1514 = vadd.f32 %v1404, %v1486
      %v1515 = vadd.f32 %v1405, %v1491
      %v1516 = vadd.f32 %v1406, %v1494
      %v1517 = vadd.f32 %v1407, %v1499
      %v1518 = vadd.f32 %v1408, %v1502
      %v1519 = vadd.f32 %v1409, %v1507
      %v1520 = vadd.f32 %v1410, %v1510
      %1521 = vst [vmem:[#allocation2] sm:$0xff] %v1513
      %1522 = vst [vmem:[#allocation2 + $0x8] sm:$0xff] %v1514
      %1523 = vst [vmem:[#allocation2 + $0x10] sm:$0xff] %v1515
      %1524 = vst [vmem:[#allocation2 + $0x18] sm:$0xff] %v1516
      %1525 = vst [vmem:[#allocation2 + $0x20] sm:$0xff] %v1517
      %1526 = vst [vmem:[#allocation2 + $0x28] sm:$0xff] %v1518
      %1527 = vst [vmem:[#allocation2 + $0x30] sm:$0xff] %v1519
      %1528 = vst [vmem:[#allocation2 + $0x38] sm:$0xff] %v1520
      %v1529 = vld [vmem:[%s1259] sm:$0xf]
      %v1530 = vld [vmem:[%s1259 + $0x4] sm:$0x1]
      %v1531 = vld [vmem:[%s1259 + $0x8] sm:$0xf]
      %v1532 = vld [vmem:[%s1259 + $0xc] sm:$0x1]
      %v1533 = vld [vmem:[%s1259 + $0x10] sm:$0xf]
      %v1534 = vld [vmem:[%s1259 + $0x14] sm:$0x1]
      %v1535 = vld [vmem:[%s1259 + $0x18] sm:$0xf]
      %v1536 = vld [vmem:[%s1259 + $0x1c] sm:$0x1]
      %v1537 = vld [vmem:[%s1259 + $0x20] sm:$0xf]
      %v1538 = vld [vmem:[%s1259 + $0x24] sm:$0x1]
      %v1539 = vld [vmem:[%s1259 + $0x28] sm:$0xf]
      %v1540 = vld [vmem:[%s1259 + $0x2c] sm:$0x1]
      %v1541 = vld [vmem:[%s1259 + $0x30] sm:$0xf]
      %v1542 = vld [vmem:[%s1259 + $0x34] sm:$0x1]
      %v1543 = vld [vmem:[%s1259 + $0x38] sm:$0xf]
      %v1544 = vld [vmem:[%s1259 + $0x3c] sm:$0x1]
      %v1546 = vshrl.u32 %v1529, 16
      %v1548 = vrot.slane %v1546, 4
      %v1549 = vshll.u32 %v1529, 16
      %v1551 = vrot.slane %v1549, 5
      %v1552 = vor.u32 %v1548, %v1551
      %v1553 = vrot.slane %v1552, 4
      %v1555 = vshll.u32 %v1530, 16
      %v1557 = vrot.slane %v1555, 5
      %v1558 = vsel %vm512, %v1553, %v1557
      %v1560 = vshrl.u32 %v1531, 16
      %v1562 = vrot.slane %v1560, 4
      %v1563 = vshll.u32 %v1531, 16
      %v1565 = vrot.slane %v1563, 5
      %v1566 = vor.u32 %v1562, %v1565
      %v1567 = vrot.slane %v1566, 4
      %v1569 = vshll.u32 %v1532, 16
      %v1571 = vrot.slane %v1569, 5
      %v1572 = vsel %vm512, %v1567, %v1571
      %v1574 = vshrl.u32 %v1533, 16
      %v1576 = vrot.slane %v1574, 4
      %v1577 = vshll.u32 %v1533, 16
      %v1579 = vrot.slane %v1577, 5
      %v1580 = vor.u32 %v1576, %v1579
      %v1581 = vrot.slane %v1580, 4
      %v1583 = vshll.u32 %v1534, 16
      %v1585 = vrot.slane %v1583, 5
      %v1586 = vsel %vm512, %v1581, %v1585
      %v1588 = vshrl.u32 %v1535, 16
      %v1590 = vrot.slane %v1588, 4
      %v1591 = vshll.u32 %v1535, 16
      %v1593 = vrot.slane %v1591, 5
      %v1594 = vor.u32 %v1590, %v1593
      %v1595 = vrot.slane %v1594, 4
      %v1597 = vshll.u32 %v1536, 16
      %v1599 = vrot.slane %v1597, 5
      %v1600 = vsel %vm512, %v1595, %v1599
      %v1602 = vshrl.u32 %v1537, 16
      %v1604 = vrot.slane %v1602, 4
      %v1605 = vshll.u32 %v1537, 16
      %v1607 = vrot.slane %v1605, 5
      %v1608 = vor.u32 %v1604, %v1607
      %v1609 = vrot.slane %v1608, 4
      %v1611 = vshll.u32 %v1538, 16
      %v1613 = vrot.slane %v1611, 5
      %v1614 = vsel %vm512, %v1609, %v1613
      %v1616 = vshrl.u32 %v1539, 16
      %v1618 = vrot.slane %v1616, 4
      %v1619 = vshll.u32 %v1539, 16
      %v1621 = vrot.slane %v1619, 5
      %v1622 = vor.u32 %v1618, %v1621
      %v1623 = vrot.slane %v1622, 4
      %v1625 = vshll.u32 %v1540, 16
      %v1627 = vrot.slane %v1625, 5
      %v1628 = vsel %vm512, %v1623, %v1627
      %v1630 = vshrl.u32 %v1541, 16
      %v1632 = vrot.slane %v1630, 4
      %v1633 = vshll.u32 %v1541, 16
      %v1635 = vrot.slane %v1633, 5
      %v1636 = vor.u32 %v1632, %v1635
      %v1637 = vrot.slane %v1636, 4
      %v1639 = vshll.u32 %v1542, 16
      %v1641 = vrot.slane %v1639, 5
      %v1642 = vsel %vm512, %v1637, %v1641
      %v1644 = vshrl.u32 %v1543, 16
      %v1646 = vrot.slane %v1644, 4
      %v1647 = vshll.u32 %v1543, 16
      %v1649 = vrot.slane %v1647, 5
      %v1650 = vor.u32 %v1646, %v1649
      %v1651 = vrot.slane %v1650, 4
      %v1653 = vshll.u32 %v1544, 16
      %v1655 = vrot.slane %v1653, 5
      %v1656 = vsel %vm512, %v1651, %v1655
      %v1657 = vld [vmem:[#allocation2] sm:$0xff]
      %v1658 = vld [vmem:[#allocation2 + $0x8] sm:$0xff]
      %v1659 = vld [vmem:[#allocation2 + $0x10] sm:$0xff]
      %v1660 = vld [vmem:[#allocation2 + $0x18] sm:$0xff]
      %v1661 = vld [vmem:[#allocation2 + $0x20] sm:$0xff]
      %v1662 = vld [vmem:[#allocation2 + $0x28] sm:$0xff]
      %v1663 = vld [vmem:[#allocation2 + $0x30] sm:$0xff]
      %v1664 = vld [vmem:[#allocation2 + $0x38] sm:$0xff]
      %s1665 = scalar_lea.vmem %s1, 32
      %v1666 = vld [vmem:[%s1665] sm:$0xf]
      %v1667 = vunpack.c.l.b16 %v1558
      %v1668 = vunpack.c.l.b16 %v1572
      %v1669 = vunpack.c.l.b16 %v1586
      %v1670 = vunpack.c.l.b16 %v1600
      %v1671 = vunpack.c.l.b16 %v1614
      %v1672 = vunpack.c.l.b16 %v1628
      %v1673 = vunpack.c.l.b16 %v1642
      %v1674 = vunpack.c.l.b16 %v1656
      %v1675 = vpack.c.b16 %v1668, %v1667
      %v1676 = vpack.c.b16 %v1670, %v1669
      %v1677 = vpack.c.b16 %v1672, %v1671
      %v1678 = vpack.c.b16 %v1674, %v1673
      %v1680 = vsel %vm261, %v1675, 0
      %v1683 = vsel %vm261, %v1676, 0
      %v1686 = vsel %vm261, %v1677, 0
      %v1689 = vsel %vm261, %v1678, 0
      %v1692 = vsel %vm274, %v1666, 0
      %1694 = vmatprep.subr.bf16.mxu0 0
      %1695 = vmatpush1.bf16.msra.mxu0 %v1692
      %1696 = vmatprep.subr.bf16.mxu0 0
      %1697 = vmatpush1.bf16.msra.mxu0 0
      %1698 = vmatprep.subr.bf16.mxu0 0
      %1699 = vmatpush1.bf16.msra.mxu0 0
      %1700 = vmatprep.subr.bf16.mxu0 0
      %1701 = vmatpush1.bf16.msra.mxu0 0
      %1702 = vmatprep.subr.bf16.mxu0 0
      %1703 = vmatpush1.bf16.msra.mxu0 0
      %1704 = vmatprep.subr.bf16.mxu0 0
      %1705 = vmatpush1.bf16.msra.mxu0 0
      %1706 = vmatprep.subr.bf16.mxu0 0
      %1707 = vmatpush1.bf16.msra.mxu0 0
      %1708 = vmatprep.subr.bf16.mxu0 0
      %1709 = vmatpush1.bf16.msra.mxu0 0
      %1710 = vmatprep.subr.bf16.mxu0 0
      %1711 = vmatpush1.bf16.msra.mxu0 0
      %1712 = vmatprep.subr.bf16.mxu0 0
      %1713 = vmatpush1.bf16.msra.mxu0 0
      %1714 = vmatprep.subr.bf16.mxu0 0
      %1715 = vmatpush1.bf16.msra.mxu0 0
      %1716 = vmatprep.subr.bf16.mxu0 0
      %1717 = vmatpush1.bf16.msra.mxu0 0
      %1718 = vmatprep.subr.bf16.mxu0 0
      %1719 = vmatpush1.bf16.msra.mxu0 0
      %1720 = vmatprep.subr.bf16.mxu0 0
      %1721 = vmatpush1.bf16.msra.mxu0 0
      %1722 = vmatprep.subr.bf16.mxu0 0
      %1723 = vmatpush1.bf16.msra.mxu0 0
      %1724 = vmatprep.subr.bf16.mxu0 0
      %1725 = vmatpush1.bf16.msra.mxu0 0
      %1726 = vmatprep.mubr.bf16.mxu0 0
      %1727 = vmatmul.mubr.bf16.gmra.mrb[0].mxu0 %v1680
      %v1728 = vpop.f32.mrb[0].mxu0
      %v1729 = vadd.f32 0.0, %v1728
      %v1730 = vpop.f32.mrb[0].mxu0
      %v1731 = vpop.f32.mrb[0].mxu0
      %v1732 = vadd.f32 0.0, %v1731
      %v1733 = vpop.f32.mrb[0].mxu0
      %1734 = vmatprep.mubr.bf16.mxu0 0
      %1735 = vmatmul.mubr.bf16.gmra.mrb[0].mxu0 %v1683
      %v1736 = vpop.f32.mrb[0].mxu0
      %v1737 = vadd.f32 0.0, %v1736
      %v1738 = vpop.f32.mrb[0].mxu0
      %v1739 = vpop.f32.mrb[0].mxu0
      %v1740 = vadd.f32 0.0, %v1739
      %v1741 = vpop.f32.mrb[0].mxu0
      %1742 = vmatprep.mubr.bf16.mxu0 0
      %1743 = vmatmul.mubr.bf16.gmra.mrb[0].mxu0 %v1686
      %v1744 = vpop.f32.mrb[0].mxu0
      %v1745 = vadd.f32 0.0, %v1744
      %v1746 = vpop.f32.mrb[0].mxu0
      %v1747 = vpop.f32.mrb[0].mxu0
      %v1748 = vadd.f32 0.0, %v1747
      %v1749 = vpop.f32.mrb[0].mxu0
      %1750 = vmatprep.mubr.bf16.mxu0 0
      %1751 = vmatmul.mubr.bf16.gmra.mrb[0].mxu0 %v1689
      %v1752 = vpop.f32.mrb[0].mxu0
      %v1753 = vadd.f32 0.0, %v1752
      %v1754 = vpop.f32.mrb[0].mxu0
      %v1755 = vpop.f32.mrb[0].mxu0
      %v1756 = vadd.f32 0.0, %v1755
      %v1757 = vpop.f32.mrb[0].mxu0
      %1758 = vdwg.mxu0
      %v1759 = vadd.f32 %v1657, %v1729
      %v1760 = vadd.f32 %v1658, %v1732
      %v1761 = vadd.f32 %v1659, %v1737
      %v1762 = vadd.f32 %v1660, %v1740
      %v1763 = vadd.f32 %v1661, %v1745
      %v1764 = vadd.f32 %v1662, %v1748
      %v1765 = vadd.f32 %v1663, %v1753
      %v1766 = vadd.f32 %v1664, %v1756
      %1767 = vst [vmem:[#allocation2] sm:$0xff] %v1759
      %1768 = vst [vmem:[#allocation2 + $0x8] sm:$0xff] %v1760
      %1769 = vst [vmem:[#allocation2 + $0x10] sm:$0xff] %v1761
      %1770 = vst [vmem:[#allocation2 + $0x18] sm:$0xff] %v1762
      %1771 = vst [vmem:[#allocation2 + $0x20] sm:$0xff] %v1763
      %1772 = vst [vmem:[#allocation2 + $0x28] sm:$0xff] %v1764
      %1773 = vst [vmem:[#allocation2 + $0x30] sm:$0xff] %v1765
      %1774 = vst [vmem:[#allocation2 + $0x38] sm:$0xff] %v1766
      %v1775 = vld [vmem:[#allocation2] sm:$0xff]
      %v1776 = vld [vmem:[#allocation2 + $0x8] sm:$0xff]
      %v1777 = vld [vmem:[#allocation2 + $0x10] sm:$0xff]
      %v1778 = vld [vmem:[#allocation2 + $0x18] sm:$0xff]
      %v1779 = vld [vmem:[#allocation2 + $0x20] sm:$0xff]
      %v1780 = vld [vmem:[#allocation2 + $0x28] sm:$0xff]
      %v1781 = vld [vmem:[#allocation2 + $0x30] sm:$0xff]
      %v1782 = vld [vmem:[#allocation2 + $0x38] sm:$0xff]
      %1783 = vst [vmem:[%s208] sm:$0xff] %v1775
      %1784 = vst [vmem:[%s208 + $0x8] sm:$0xff] %v1776
      %1785 = vst [vmem:[%s208 + $0x10] sm:$0xff] %v1777
      %1786 = vst [vmem:[%s208 + $0x18] sm:$0xff] %v1778
      %1787 = vst [vmem:[%s208 + $0x20] sm:$0xff] %v1779
      %1788 = vst [vmem:[%s208 + $0x28] sm:$0xff] %v1780
      %1789 = vst [vmem:[%s208 + $0x30] sm:$0xff] %v1781
      %1790 = vst [vmem:[%s208 + $0x38] sm:$0xff] %v1782
      %v1791 = vadd.f32 %v1775, %v1776
      %v1792 = vadd.f32 %v1791, %v1777
      %v1793 = vadd.f32 %v1792, %v1778
      %v1794 = vadd.f32 %v1793, %v1779
      %v1795 = vadd.f32 %v1794, %v1780
      %v1796 = vadd.f32 %v1795, %v1781
      %v1797 = vadd.f32 %v1796, %v1782
      %v1798 = vrot.slane %v1797, 4
      %v1799 = vadd.f32 %v1797, %v1798
      %v1800 = vrot.slane %v1799, 2
      %v1801 = vadd.f32 %v1799, %v1800
      %v1802 = vrot.slane %v1801, 1
      %v1803 = vadd.f32 %v1801, %v1802
      %1804 = vst [vmem:[%s211] sm:$0x1] %v1803
      %v1805 = vmul.f32 %v1775, %v1775
      %v1806 = vmul.f32 %v1776, %v1776
      %v1807 = vmul.f32 %v1777, %v1777
      %v1808 = vmul.f32 %v1778, %v1778
      %v1809 = vmul.f32 %v1779, %v1779
      %v1810 = vmul.f32 %v1780, %v1780
      %v1811 = vmul.f32 %v1781, %v1781
      %v1812 = vmul.f32 %v1782, %v1782
      %v1813 = vadd.f32 %v1805, %v1806
      %v1814 = vadd.f32 %v1813, %v1807
      %v1815 = vadd.f32 %v1814, %v1808
      %v1816 = vadd.f32 %v1815, %v1809
      %v1817 = vadd.f32 %v1816, %v1810
      %v1818 = vadd.f32 %v1817, %v1811
      %v1819 = vadd.f32 %v1818, %v1812
      %v1820 = vrot.slane %v1819, 4
      %v1821 = vadd.f32 %v1819, %v1820
      %v1822 = vrot.slane %v1821, 2
      %v1823 = vadd.f32 %v1821, %v1822
      %v1824 = vrot.slane %v1823, 1
      %v1825 = vadd.f32 %v1823, %v1824
      %1826 = vst [vmem:[%s214] sm:$0x1] %v1825
      %p1827 = scmp.lt.s32.totalorder %s16, 1
      %s1828 = scalar_select %p1827, %s16, 1
      %s1829 = smul.addr %s1828, 8
      %s1830 = smul.addr %s1829, 8
      %s1831 = scalar_lea.vmem %s2, %s1830
      %p1832 = scmp.lt.s32.totalorder %s16, 1
      %s1833 = scalar_select %p1832, %s16, 1
      %s1834 = scalar_lea.vmem %s3, %s1833
      %p1835 = scmp.lt.s32.totalorder %s16, 1
      %s1836 = scalar_select %p1835, %s16, 1
      %s1837 = scalar_lea.vmem %s4, %s1836
      // Predicated region
      $region29: #{block_forward_nhwc.2} parent=27 // pred_check
        %p1838 = pneg %p81
      $region30: #{block_forward_nhwc.2} parent=27 // pred_check_branch
        %1840 = sbr.rel (%p1838) target = $region32
      $region31: #{block_forward_nhwc.2} parent=27 // pred_region
        _
      $region32: #{block_forward_nhwc.2} parent=27 // pred_fallthru
        _
      // Predicated region
      $region33: #{block_forward_nhwc.2} parent=27 // pred_check
        %p1841 = pneg %p107
      $region34: #{block_forward_nhwc.2} parent=27 // pred_check_branch
        %1843 = sbr.rel (%p1841) target = $region36
      $region35: #{block_forward_nhwc.2} parent=27 // pred_region
        _
      $region36: #{block_forward_nhwc.2} parent=27 // pred_fallthru
        _
      // Predicated region
      $region37: #{block_forward_nhwc.2} parent=27 // pred_check
        %p1844 = pneg %p133
      $region38: #{block_forward_nhwc.2} parent=27 // pred_check_branch
        %1846 = sbr.rel (%p1844) target = $region40
      $region39: #{block_forward_nhwc.2} parent=27 // pred_region
        _
      $region40: #{block_forward_nhwc.2} parent=27 // pred_fallthru
        _
    $region28: #{block_forward_nhwc.2} parent=5 // pred_fallthru
      _
    %p1847 = scmp.le.s32.totalorder 2, %s11
    // Predicated region
    $region41: #{block_forward_nhwc.2} parent=5 // pred_check
      %p1848 = pneg %p1847
    $region42: #{block_forward_nhwc.2} parent=5 // pred_check_branch
      %1850 = sbr.rel (%p1848) target = $region44
    $region43: #{block_forward_nhwc.2} parent=5 // pred_region
      %s1851 = ssub.s32 %s11, 2
      // Predicated region
      $region45: #{block_forward_nhwc.2} parent=43 // pred_check
        %p1852 = pneg %p87
      $region46: #{block_forward_nhwc.2} parent=43 // pred_check_branch
        %1854 = sbr.rel (%p1852) target = $region48
      $region47: #{block_forward_nhwc.2} parent=43 // pred_region
        %p1855 = scmp.lt.s32.totalorder %s17, 1
        %s1856 = scalar_select %p1855, %s17, 1
        %s1857 = smul.addr %s1856, 8
        %s1858 = smul.addr %s1857, 8
        %s1859 = scalar_lea.vmem %s2, %s1858
      $region48: #{block_forward_nhwc.2} parent=43 // pred_fallthru
        _
      // Predicated region
      $region49: #{block_forward_nhwc.2} parent=43 // pred_check
        %p1860 = pneg %p113
      $region50: #{block_forward_nhwc.2} parent=43 // pred_check_branch
        %1862 = sbr.rel (%p1860) target = $region52
      $region51: #{block_forward_nhwc.2} parent=43 // pred_region
        %p1863 = scmp.lt.s32.totalorder %s17, 1
        %s1864 = scalar_select %p1863, %s17, 1
        %s1865 = scalar_lea.vmem %s3, %s1864
      $region52: #{block_forward_nhwc.2} parent=43 // pred_fallthru
        _
      // Predicated region
      $region53: #{block_forward_nhwc.2} parent=43 // pred_check
        %p1866 = pneg %p139
      $region54: #{block_forward_nhwc.2} parent=43 // pred_check_branch
        %1868 = sbr.rel (%p1866) target = $region56
      $region55: #{block_forward_nhwc.2} parent=43 // pred_region
        %p1869 = scmp.lt.s32.totalorder %s17, 1
        %s1870 = scalar_select %p1869, %s17, 1
        %s1871 = scalar_lea.vmem %s4, %s1870
      $region56: #{block_forward_nhwc.2} parent=43 // pred_fallthru
        _
    $region44: #{block_forward_nhwc.2} parent=5 // pred_fallthru
      _
  $region6: #{block_forward_nhwc.2} parent=0 // loop_footer
    %s15 = sadd.s32 1, %s11
  $region7: #{block_forward_nhwc.2} parent=0 // loop_footer_branch
    %10 = sbr.rel target = $region3
  $region8: #{block_forward_nhwc.2} parent=0 // loop_exit
    _

</llo_original>
